<compile_context>
chip_gen: v7x
topology: tpu7x:2x2x1
jax: 0.10.0
libtpu: 0.0.40
codegen_flags: <defaults>
</compile_context>

<pallas_src>
import functools

import jax
import jax.numpy as jnp
from jax.experimental import pallas as pl
from jax.experimental.pallas import tpu as pltpu


def _critic_kernel(obs_ref, act_ref, w1o_ref, w1a_ref, b1_ref,
                   w2_ref, b2_ref, w3_ref, b3_ref, o_ref):
    """One batch tile of the Critic forward.

    obs:(TB,Do)  act:(TB,Da)   w1o:(Do,H) w1a:(Da,H) b1:(1,H)
    w2:(H,H) b2:(1,H)  w3:(1,H) f32  b3:(1,) in SMEM   out:(TB,1) f32.
    """
    cdt = w2_ref.dtype  # MXU operand dtype (bf16); accumulation stays f32

    # ---- fc1 (split over obs/act -> no concat) + bias + ReLU (f32, VPU) ----
    h1 = jnp.dot(obs_ref[...].astype(cdt), w1o_ref[...],
                 preferred_element_type=jnp.float32)
    h1 = h1 + jnp.dot(act_ref[...].astype(cdt), w1a_ref[...],
                      preferred_element_type=jnp.float32)
    h1 = jnp.maximum(h1 + b1_ref[...], 0.0)

    # ---- fc2 + bias + ReLU -------------------------------------------------
    h2 = jnp.dot(h1.astype(cdt), w2_ref[...],
                 preferred_element_type=jnp.float32)
    h2 = jnp.maximum(h2 + b2_ref[...], 0.0)

    # ---- q_out: width-1 layer on VPU (mul) + XLU (lane reduce), not MXU ----
    q = jnp.sum(h2 * w3_ref[...], axis=-1, keepdims=True) + b3_ref[0]  # (TB,1)
    o_ref[...] = q.astype(o_ref.dtype)   # narrow (TB,1) writeback


@functools.partial(jax.jit, static_argnames=("block_b",))
def critic_forward(obs, act, kparams, *, block_b=1024):
    """obs:(B,obs_dim) f32, act:(B,act_dim) f32 -> q:(B,1) f32."""
    w1o, w1a, b1, w2, b2, w3, b3 = kparams
    B, obs_dim = obs.shape
    act_dim = act.shape[1]
    hidden = w2.shape[0]

    # Batch tile: large by default (weights are resident, so VMEM use is tiny
    # and a big tile amortizes the ~0.35us per-grid-step overhead).
    # When tiling, tb must be a multiple of 8; a single full-batch block is
    # allowed for any B via the "block == full array dim" exception.
    block_b = max(8, (int(block_b) // 8) * 8)
    tb = B if B <= block_b else block_b
    grid_b = pl.cdiv(B, tb)
    # No jnp.pad: Pallas clamps the ragged edge block; garbage OOB rows only
    # produce garbage q rows that are never written back.
    # TODO(synk): on v7x (2 TensorCores) pick tb so grid_b is even for balance.

    # VMEM budget: resident params + double-buffered streamed tiles + f32
    # h1/h2 intermediates. Clamp to 48 MiB (headroom under v7x's 64 MiB).
    def nbytes(a):
        return int(a.size) * a.dtype.itemsize

    resident = sum(nbytes(a) for a in (w1o, w1a, b1, w2, b2, w3))
    streamed = 2 * tb * (obs_dim + act_dim + 1) * 4
    interm = 3 * tb * hidden * 4
    vmem_limit = int(min(max(2 * (resident + streamed + interm), 16 << 20),
                         48 << 20))

    return pl.pallas_call(
        _critic_kernel,
        out_shape=jax.ShapeDtypeStruct((B, 1), jnp.float32),
        grid=(grid_b,),
        in_specs=[
            pl.BlockSpec((tb, obs_dim), lambda i: (i, 0)),        # obs tile (streamed)
            pl.BlockSpec((tb, act_dim), lambda i: (i, 0)),        # act tile (streamed)
            pl.BlockSpec(w1o.shape, lambda i: (0, 0)),            # resident weights
            pl.BlockSpec(w1a.shape, lambda i: (0, 0)),
            pl.BlockSpec(b1.shape, lambda i: (0, 0)),
            pl.BlockSpec(w2.shape, lambda i: (0, 0)),
            pl.BlockSpec(b2.shape, lambda i: (0, 0)),
            pl.BlockSpec(w3.shape, lambda i: (0, 0)),
            pl.BlockSpec(memory_space=pltpu.MemorySpace.SMEM),    # scalar b3
        ],
        out_specs=pl.BlockSpec((tb, 1), lambda i: (i, 0)),        # narrow q output
        compiler_params=pltpu.CompilerParams(
            dimension_semantics=("parallel",),                    # v7x: 2 TCs
            vmem_limit_bytes=vmem_limit,
        ),
    )(obs, act, w1o, w1a, b1, w2, b2, w3, b3)


# --------------------------- params & references ---------------------------

def init_torch_params(key, obs_dim, act_dim, hidden_dim):
    """PyTorch nn.Linear-style params: weight (out,in), bias (out,)."""
    in_dim = obs_dim + act_dim
    ks = jax.random.split(key, 6)

    def lin(kw, kb, fan_in, fan_out):
        bound = 1.0 / jnp.sqrt(jnp.float32(fan_in))
        w = jax.random.uniform(kw, (fan_out, fan_in), jnp.float32, -bound, bound)
        b = jax.random.uniform(kb, (fan_out,), jnp.float32, -bound, bound)
        return w, b

    return (lin(ks[0], ks[1], in_dim, hidden_dim),
            lin(ks[2], ks[3], hidden_dim, hidden_dim),
            lin(ks[4], ks[5], hidden_dim, 1))


def prepare_kernel_params(torch_params, obs_dim, matmul_dtype=jnp.bfloat16):
    """Transpose to (in,out), split fc1 over obs/act, cast MXU weights to bf16."""
    (w1, b1), (w2, b2), (w3, b3) = torch_params
    w1t = w1.T                                       # (obs+act, H)
    w1o = w1t[:obs_dim].astype(matmul_dtype)         # (obs_dim, H)
    w1a = w1t[obs_dim:].astype(matmul_dtype)         # (act_dim, H)
    w2t = w2.T.astype(matmul_dtype)                  # (H, H)
    w3r = w3.astype(jnp.float32)                     # (1, H) -> VPU path, keep f32
    return (w1o, w1a, b1.reshape(1, -1).astype(jnp.float32),
            w2t, b2.reshape(1, -1).astype(jnp.float32),
            w3r, b3.reshape(1,).astype(jnp.float32))


def critic_reference_f32(obs, act, torch_params):
    (w1, b1), (w2, b2), (w3, b3) = torch_params
    x = jnp.concatenate([obs, act], axis=-1)
    h1 = jax.nn.relu(x @ w1.T + b1)
    h2 = jax.nn.relu(h1 @ w2.T + b2)
    return h2 @ w3.T + b3


def critic_reference_matched(obs, act, kparams):
    """Mirrors the kernel math exactly (bf16 MXU operands, f32 accumulation)."""
    w1o, w1a, b1, w2, b2, w3, b3 = kparams
    cdt = w2.dtype
    h1 = (jnp.dot(obs.astype(cdt), w1o, preferred_element_type=jnp.float32)
          + jnp.dot(act.astype(cdt), w1a, preferred_element_type=jnp.float32))
    h1 = jnp.maximum(h1 + b1, 0.0)
    h2 = jnp.dot(h1.astype(cdt), w2, preferred_element_type=jnp.float32)
    h2 = jnp.maximum(h2 + b2, 0.0)
    return jnp.sum(h2 * w3, axis=-1, keepdims=True) + b3[0]


if __name__ == "__main__":
    # Module-default hidden width (256); small RL-ish batch that is NOT a
    # multiple of 8 / of the tile, to exercise ragged-edge handling.
    B, obs_dim, act_dim, hidden_dim = 300, 24, 8, 256

    key = jax.random.PRNGKey(0)
    k_obs, k_act, k_par = jax.random.split(key, 3)
    obs = jax.random.normal(k_obs, (B, obs_dim), jnp.float32)
    act = jax.random.normal(k_act, (B, act_dim), jnp.float32)

    torch_params = init_torch_params(k_par, obs_dim, act_dim, hidden_dim)
    kparams = prepare_kernel_params(torch_params, obs_dim, jnp.bfloat16)

    # References.
    q_matched = critic_reference_matched(obs, act, kparams)
    q_f32 = critic_reference_f32(obs, act, torch_params)

    # 1) Default big tile: single block covering the full batch (grid=1).
    q = jax.block_until_ready(critic_forward(obs, act, kparams))
    assert q.shape == (B, 1)
    assert jnp.allclose(q, q_matched, atol=2e-3, rtol=2e-3), \
        float(jnp.max(jnp.abs(q - q_matched)))
    assert jnp.allclose(q, q_f32, atol=3e-2, rtol=3e-2), \
        float(jnp.max(jnp.abs(q - q_f32)))

    # 2) Small tile: multi-step grid with a ragged edge block (300 = 2*128 + 44).
    q_tiled = jax.block_until_ready(critic_forward(obs, act, kparams, block_b=128))
    assert q_tiled.shape == (B, 1)
    assert jnp.allclose(q_tiled, q_matched, atol=2e-3, rtol=2e-3), \
        float(jnp.max(jnp.abs(q_tiled - q_matched)))

    print("KERNEL_OK")
</pallas_src>

<mosaic_0001>
module attributes {stable_mosaic.version = 11 : i64} {
  func.func @_critic_kernel(%arg0: i32, %arg1: memref<300x24xf32, #tpu.memory_space<vmem>>, %arg2: memref<300x8xf32, #tpu.memory_space<vmem>>, %arg3: memref<24x256xbf16, #tpu.memory_space<vmem>>, %arg4: memref<8x256xbf16, #tpu.memory_space<vmem>>, %arg5: memref<1x256xf32, #tpu.memory_space<vmem>>, %arg6: memref<256x256xbf16, #tpu.memory_space<vmem>>, %arg7: memref<1x256xf32, #tpu.memory_space<vmem>>, %arg8: memref<1x256xf32, #tpu.memory_space<vmem>>, %arg9: memref<1xf32, #tpu.memory_space<smem>>, %arg10: memref<300x1xf32, #tpu.memory_space<vmem>>) attributes {dimension_semantics = [#tpu.dimension_semantics<parallel>], iteration_bounds = array<i64: 1>, scalar_prefetch = 0 : i64, scratch_operands = 0 : i64, tpu.core_type = #tpu.core_type<tc>, window_params = [{transform_indices = @transform_0, window_bounds = array<i64: 300, 24>}, {transform_indices = @transform_1, window_bounds = array<i64: 300, 8>}, {pipeline_mode = #tpu.pipeline_mode<synchronous>, transform_indices = @transform_2, window_bounds = array<i64: 24, 256>}, {pipeline_mode = #tpu.pipeline_mode<synchronous>, transform_indices = @transform_3, window_bounds = array<i64: 8, 256>}, {pipeline_mode = #tpu.pipeline_mode<synchronous>, transform_indices = @transform_4, window_bounds = array<i64: 1, 256>}, {pipeline_mode = #tpu.pipeline_mode<synchronous>, transform_indices = @transform_5, window_bounds = array<i64: 256, 256>}, {pipeline_mode = #tpu.pipeline_mode<synchronous>, transform_indices = @transform_6, window_bounds = array<i64: 1, 256>}, {pipeline_mode = #tpu.pipeline_mode<synchronous>, transform_indices = @transform_7, window_bounds = array<i64: 1, 256>}, {transform_indices = @transform_8, window_bounds = array<i64: 1>}, {transform_indices = @transform_9, window_bounds = array<i64: 300, 1>}]} {
    %c0 = arith.constant 0 : index
    %c0_0 = arith.constant 0 : index
    %0 = vector.load %arg1[%c0, %c0_0] : memref<300x24xf32, #tpu.memory_space<vmem>>, vector<300x24xf32>
    %1 = arith.truncf %0 : vector<300x24xf32> to vector<300x24xbf16>
    %c0_1 = arith.constant 0 : index
    %c0_2 = arith.constant 0 : index
    %2 = vector.load %arg3[%c0_1, %c0_2] : memref<24x256xbf16, #tpu.memory_space<vmem>>, vector<24x256xbf16>
    %cst = arith.constant dense<0.000000e+00> : vector<300x256xf32>
    %3 = tpu.matmul %1, %2, %cst {dimension_numbers = #tpu.dot_dimension_numbers<[1], [0], [0], [1], [0, 0, 1, 1], [], []>} : vector<300x24xbf16>, vector<24x256xbf16>, vector<300x256xf32> -> vector<300x256xf32>
    %c0_3 = arith.constant 0 : index
    %c0_4 = arith.constant 0 : index
    %4 = vector.load %arg2[%c0_3, %c0_4] : memref<300x8xf32, #tpu.memory_space<vmem>>, vector<300x8xf32>
    %5 = arith.truncf %4 : vector<300x8xf32> to vector<300x8xbf16>
    %c0_5 = arith.constant 0 : index
    %c0_6 = arith.constant 0 : index
    %6 = vector.load %arg4[%c0_5, %c0_6] : memref<8x256xbf16, #tpu.memory_space<vmem>>, vector<8x256xbf16>
    %cst_7 = arith.constant dense<0.000000e+00> : vector<300x256xf32>
    %7 = tpu.matmul %5, %6, %cst_7 {dimension_numbers = #tpu.dot_dimension_numbers<[1], [0], [0], [1], [0, 0, 1, 1], [], []>} : vector<300x8xbf16>, vector<8x256xbf16>, vector<300x256xf32> -> vector<300x256xf32>
    %8 = arith.addf %3, %7 : vector<300x256xf32>
    %c0_8 = arith.constant 0 : index
    %c0_9 = arith.constant 0 : index
    %9 = vector.load %arg5[%c0_8, %c0_9] : memref<1x256xf32, #tpu.memory_space<vmem>>, vector<1x256xf32>
    %10 = vector.broadcast %9 : vector<1x256xf32> to vector<300x256xf32>
    %11 = arith.addf %8, %10 : vector<300x256xf32>
    %cst_10 = arith.constant 0.000000e+00 : f32
    %12 = vector.broadcast %cst_10 : f32 to vector<300x256xf32>
    %13 = arith.maximumf %11, %12 : vector<300x256xf32>
    %14 = arith.truncf %13 : vector<300x256xf32> to vector<300x256xbf16>
    %c0_11 = arith.constant 0 : index
    %c0_12 = arith.constant 0 : index
    %15 = vector.load %arg6[%c0_11, %c0_12] : memref<256x256xbf16, #tpu.memory_space<vmem>>, vector<256x256xbf16>
    %cst_13 = arith.constant dense<0.000000e+00> : vector<300x256xf32>
    %16 = tpu.matmul %14, %15, %cst_13 {dimension_numbers = #tpu.dot_dimension_numbers<[1], [0], [0], [1], [0, 0, 1, 1], [], []>} : vector<300x256xbf16>, vector<256x256xbf16>, vector<300x256xf32> -> vector<300x256xf32>
    %c0_14 = arith.constant 0 : index
    %c0_15 = arith.constant 0 : index
    %17 = vector.load %arg7[%c0_14, %c0_15] : memref<1x256xf32, #tpu.memory_space<vmem>>, vector<1x256xf32>
    %18 = vector.broadcast %17 : vector<1x256xf32> to vector<300x256xf32>
    %19 = arith.addf %16, %18 : vector<300x256xf32>
    %cst_16 = arith.constant 0.000000e+00 : f32
    %20 = vector.broadcast %cst_16 : f32 to vector<300x256xf32>
    %21 = arith.maximumf %19, %20 : vector<300x256xf32>
    %c0_17 = arith.constant 0 : index
    %c0_18 = arith.constant 0 : index
    %22 = vector.load %arg8[%c0_17, %c0_18] : memref<1x256xf32, #tpu.memory_space<vmem>>, vector<1x256xf32>
    %23 = vector.broadcast %22 : vector<1x256xf32> to vector<300x256xf32>
    %24 = arith.mulf %21, %23 : vector<300x256xf32>
    %cst_19 = arith.constant dense<0.000000e+00> : vector<300xf32>
    %25 = vector.multi_reduction <add>, %24, %cst_19 [1] : vector<300x256xf32> to vector<300xf32>
    %26 = vector.shape_cast %25 : vector<300xf32> to vector<300x1xf32>
    %c0_20 = arith.constant 0 : index
    %27 = memref.load %arg9[%c0_20] : memref<1xf32, #tpu.memory_space<smem>>
    %28 = vector.broadcast %27 : f32 to vector<300x1xf32>
    %29 = arith.addf %26, %28 : vector<300x1xf32>
    %c0_21 = arith.constant 0 : index
    %c0_22 = arith.constant 0 : index
    %30 = vector.load %arg10[%c0_21, %c0_22] : memref<300x1xf32, #tpu.memory_space<vmem>>, vector<300x1xf32>
    tpu.vector_store %arg10[%c0_21, %c0_22], %29 {strides = array<i32>} : memref<300x1xf32, #tpu.memory_space<vmem>>, vector<300x1xf32>,
    return
  }
  func.func @transform_0(%arg0: i32) -> (i32, i32) {
    %c0_i32 = arith.constant 0 : i32
    %c0_i32_0 = arith.constant 0 : i32
    return %arg0, %c0_i32 : i32, i32
  }
  func.func @transform_1(%arg0: i32) -> (i32, i32) {
    %c0_i32 = arith.constant 0 : i32
    %c0_i32_0 = arith.constant 0 : i32
    return %arg0, %c0_i32 : i32, i32
  }
  func.func @transform_2(%arg0: i32) -> (i32, i32) {
    %c0_i32 = arith.constant 0 : i32
    %c0_i32_0 = arith.constant 0 : i32
    %c0_i32_1 = arith.constant 0 : i32
    return %c0_i32, %c0_i32_0 : i32, i32
  }
  func.func @transform_3(%arg0: i32) -> (i32, i32) {
    %c0_i32 = arith.constant 0 : i32
    %c0_i32_0 = arith.constant 0 : i32
    %c0_i32_1 = arith.constant 0 : i32
    return %c0_i32, %c0_i32_0 : i32, i32
  }
  func.func @transform_4(%arg0: i32) -> (i32, i32) {
    %c0_i32 = arith.constant 0 : i32
    %c0_i32_0 = arith.constant 0 : i32
    %c0_i32_1 = arith.constant 0 : i32
    return %c0_i32, %c0_i32_0 : i32, i32
  }
  func.func @transform_5(%arg0: i32) -> (i32, i32) {
    %c0_i32 = arith.constant 0 : i32
    %c0_i32_0 = arith.constant 0 : i32
    %c0_i32_1 = arith.constant 0 : i32
    return %c0_i32, %c0_i32_0 : i32, i32
  }
  func.func @transform_6(%arg0: i32) -> (i32, i32) {
    %c0_i32 = arith.constant 0 : i32
    %c0_i32_0 = arith.constant 0 : i32
    %c0_i32_1 = arith.constant 0 : i32
    return %c0_i32, %c0_i32_0 : i32, i32
  }
  func.func @transform_7(%arg0: i32) -> (i32, i32) {
    %c0_i32 = arith.constant 0 : i32
    %c0_i32_0 = arith.constant 0 : i32
    %c0_i32_1 = arith.constant 0 : i32
    return %c0_i32, %c0_i32_0 : i32, i32
  }
  func.func @transform_8(%arg0: i32) -> i32 {
    %c0_i32 = arith.constant 0 : i32
    %c0_i32_0 = arith.constant 0 : i32
    return %c0_i32 : i32
  }
  func.func @transform_9(%arg0: i32) -> (i32, i32) {
    %c0_i32 = arith.constant 0 : i32
    %c0_i32_0 = arith.constant 0 : i32
    return %arg0, %c0_i32 : i32, i32
  }
}

</mosaic_0001>

<llo_original>
// kernel: critic_forward.1
$region0: #{critic_forward.1}
  #allocation0 [shape = 'u32[]', space=smem, size = 0x4, offset = 0x4, fixed_abs, tag = 'smem constant byte address 0x4 - core index']
  #allocation1 [shape = 'u32[144,128]{1,0:T(1,128)}', space=vmem, size = 0x12000, scoped, tag = 'internal scratch']
  #allocation2 [shape = 'f32[1]{0:T(128)S(6)}', space=smem, size = 0x200, scoped, tag = 'scoped memory for critic_forward.1']
  %s0 = inlined_call_operand.vmem [shape: f32[300,24], index: 0, kind: input, shape index: {}]
  %s1 = inlined_call_operand.vmem [shape: f32[300,8], index: 1, kind: input, shape index: {}]
  %s2 = inlined_call_operand.vmem [shape: bf16[24,256], index: 2, kind: input, shape index: {}]
  %s3 = inlined_call_operand.vmem [shape: bf16[8,256], index: 3, kind: input, shape index: {}]
  %s4 = inlined_call_operand.vmem [shape: f32[1,256], index: 4, kind: input, shape index: {}]
  %s5 = inlined_call_operand.vmem [shape: bf16[256,256], index: 5, kind: input, shape index: {}]
  %s6 = inlined_call_operand.vmem [shape: f32[1,256], index: 6, kind: input, shape index: {}]
  %s7 = inlined_call_operand.vmem [shape: f32[1,256], index: 7, kind: input, shape index: {}]
  %s8 = inlined_call_operand.<no memory space> [shape: f32[1], index: 8, kind: input, shape index: {}]
  %s9 = inlined_call_operand.vmem [shape: f32[300,1], index: 9, kind: output, shape index: {}]
  %s10 = sld [smem:[#allocation0]]
  $region46: #{critic_forward.1} parent=0
    _
  %s12 = ssub.s32 1, %s10
  %s13 = scalar_select 0, %s12, %s10
  %14 = sst [smem:[#allocation2]] %s8
  // Predicated region
  $region2: #{critic_forward.1} parent=0 // pred_check
    _
  $region3: #{critic_forward.1} parent=0 // pred_check_branch
    %16 = sbr.rel (0) target = $region5
  $region4: #{critic_forward.1} parent=0 // pred_region
    _
  $region5: #{critic_forward.1} parent=0 // pred_fallthru
    _
  // Predicated region
  $region6: #{critic_forward.1} parent=0 // pred_check
    _
  $region7: #{critic_forward.1} parent=0 // pred_check_branch
    %18 = sbr.rel (0) target = $region9
  $region8: #{critic_forward.1} parent=0 // pred_region
    _
  $region9: #{critic_forward.1} parent=0 // pred_fallthru
    _
  // Predicated region
  $region10: #{critic_forward.1} parent=0 // pred_check
    _
  $region11: #{critic_forward.1} parent=0 // pred_check_branch
    %20 = sbr.rel (0) target = $region13
  $region12: #{critic_forward.1} parent=0 // pred_region
    _
  $region13: #{critic_forward.1} parent=0 // pred_fallthru
    _
  // Predicated region
  $region14: #{critic_forward.1} parent=0 // pred_check
    _
  $region15: #{critic_forward.1} parent=0 // pred_check_branch
    %22 = sbr.rel (0) target = $region17
  $region16: #{critic_forward.1} parent=0 // pred_region
    _
  $region17: #{critic_forward.1} parent=0 // pred_fallthru
    _
  // Predicated region
  $region18: #{critic_forward.1} parent=0 // pred_check
    _
  $region19: #{critic_forward.1} parent=0 // pred_check_branch
    %24 = sbr.rel (0) target = $region21
  $region20: #{critic_forward.1} parent=0 // pred_region
    _
  $region21: #{critic_forward.1} parent=0 // pred_fallthru
    _
  // Predicated region
  $region22: #{critic_forward.1} parent=0 // pred_check
    _
  $region23: #{critic_forward.1} parent=0 // pred_check_branch
    %26 = sbr.rel (0) target = $region25
  $region24: #{critic_forward.1} parent=0 // pred_region
    _
  $region25: #{critic_forward.1} parent=0 // pred_fallthru
    _
  // Predicated region
  $region26: #{critic_forward.1} parent=0 // pred_check
    _
  $region27: #{critic_forward.1} parent=0 // pred_check_branch
    %28 = sbr.rel (0) target = $region29
  $region28: #{critic_forward.1} parent=0 // pred_region
    _
  $region29: #{critic_forward.1} parent=0 // pred_fallthru
    _
  // Predicated region
  $region30: #{critic_forward.1} parent=0 // pred_check
    _
  $region31: #{critic_forward.1} parent=0 // pred_check_branch
    %30 = sbr.rel (0) target = $region33
  $region32: #{critic_forward.1} parent=0 // pred_region
    _
  $region33: #{critic_forward.1} parent=0 // pred_fallthru
    _
  // Predicated region
  $region34: #{critic_forward.1} parent=0 // pred_check
    _
  $region35: #{critic_forward.1} parent=0 // pred_check_branch
    %32 = sbr.rel (0) target = $region37
  $region36: #{critic_forward.1} parent=0 // pred_region
    _
  $region37: #{critic_forward.1} parent=0 // pred_fallthru
    _
  %v34 = vld [vmem:[%s0] sm:$0xff]
  %v35 = vld [vmem:[%s0 + $0x8] sm:$0xff]
  %v36 = vld [vmem:[%s0 + $0x10] sm:$0xff]
  %v37 = vld [vmem:[%s0 + $0x18] sm:$0xff]
  %v38 = vld [vmem:[%s0 + $0x20] sm:$0xff]
  %v39 = vld [vmem:[%s0 + $0x28] sm:$0xff]
  %v40 = vld [vmem:[%s0 + $0x30] sm:$0xff]
  %v41 = vld [vmem:[%s0 + $0x38] sm:$0xff]
  %v42 = vld [vmem:[%s0 + $0x40] sm:$0xff]
  %v43 = vld [vmem:[%s0 + $0x48] sm:$0xff]
  %v44 = vld [vmem:[%s0 + $0x50] sm:$0xff]
  %v45 = vld [vmem:[%s0 + $0x58] sm:$0xff]
  %v46 = vld [vmem:[%s0 + $0x60] sm:$0xff]
  %v47 = vld [vmem:[%s0 + $0x68] sm:$0xff]
  %v48 = vld [vmem:[%s0 + $0x70] sm:$0xff]
  %v49 = vld [vmem:[%s0 + $0x78] sm:$0xff]
  %v50 = vld [vmem:[%s0 + $0x80] sm:$0xff]
  %v51 = vld [vmem:[%s0 + $0x88] sm:$0xff]
  %v52 = vld [vmem:[%s0 + $0x90] sm:$0xff]
  %v53 = vld [vmem:[%s0 + $0x98] sm:$0xff]
  %v54 = vld [vmem:[%s0 + $0xa0] sm:$0xff]
  %v55 = vld [vmem:[%s0 + $0xa8] sm:$0xff]
  %v56 = vld [vmem:[%s0 + $0xb0] sm:$0xff]
  %v57 = vld [vmem:[%s0 + $0xb8] sm:$0xff]
  %v58 = vld [vmem:[%s0 + $0xc0] sm:$0xff]
  %v59 = vld [vmem:[%s0 + $0xc8] sm:$0xff]
  %v60 = vld [vmem:[%s0 + $0xd0] sm:$0xff]
  %v61 = vld [vmem:[%s0 + $0xd8] sm:$0xff]
  %v62 = vld [vmem:[%s0 + $0xe0] sm:$0xff]
  %v63 = vld [vmem:[%s0 + $0xe8] sm:$0xff]
  %v64 = vld [vmem:[%s0 + $0xf0] sm:$0xff]
  %v65 = vld [vmem:[%s0 + $0xf8] sm:$0xff]
  %v66 = vld [vmem:[%s0 + $0x100] sm:$0xff]
  %v67 = vld [vmem:[%s0 + $0x108] sm:$0xff]
  %v68 = vld [vmem:[%s0 + $0x110] sm:$0xff]
  %v69 = vld [vmem:[%s0 + $0x118] sm:$0xff]
  %v70 = vld [vmem:[%s0 + $0x120] sm:$0xff]
  %v71 = vld [vmem:[%s0 + $0x128] sm:$0xf]
  %v72 = vpack.c.bf16 %v35, %v34
  %v73 = vpack.c.bf16 %v37, %v36
  %v74 = vpack.c.bf16 %v39, %v38
  %v75 = vpack.c.bf16 %v41, %v40
  %v76 = vpack.c.bf16 %v43, %v42
  %v77 = vpack.c.bf16 %v45, %v44
  %v78 = vpack.c.bf16 %v47, %v46
  %v79 = vpack.c.bf16 %v49, %v48
  %v80 = vpack.c.bf16 %v51, %v50
  %v81 = vpack.c.bf16 %v53, %v52
  %v82 = vpack.c.bf16 %v55, %v54
  %v83 = vpack.c.bf16 %v57, %v56
  %v84 = vpack.c.bf16 %v59, %v58
  %v85 = vpack.c.bf16 %v61, %v60
  %v86 = vpack.c.bf16 %v63, %v62
  %v87 = vpack.c.bf16 %v65, %v64
  %v88 = vpack.c.bf16 %v67, %v66
  %v89 = vpack.c.bf16 %v69, %v68
  %v90 = vpack.c.bf16 %v71, %v70
  %v91 = vld [vmem:[%s2] sm:$0xff]
  %v92 = vld [vmem:[%s2 + $0x8] sm:$0xff]
  %v93 = vld [vmem:[%s2 + $0x10] sm:$0xff]
  %v94 = vld [vmem:[%s1] sm:$0xff]
  %v95 = vld [vmem:[%s1 + $0x8] sm:$0xff]
  %v96 = vld [vmem:[%s1 + $0x10] sm:$0xff]
  %v97 = vld [vmem:[%s1 + $0x18] sm:$0xff]
  %v98 = vld [vmem:[%s1 + $0x20] sm:$0xff]
  %v99 = vld [vmem:[%s1 + $0x28] sm:$0xff]
  %v100 = vld [vmem:[%s1 + $0x30] sm:$0xff]
  %v101 = vld [vmem:[%s1 + $0x38] sm:$0xff]
  %v102 = vld [vmem:[%s1 + $0x40] sm:$0xff]
  %v103 = vld [vmem:[%s1 + $0x48] sm:$0xff]
  %v104 = vld [vmem:[%s1 + $0x50] sm:$0xff]
  %v105 = vld [vmem:[%s1 + $0x58] sm:$0xff]
  %v106 = vld [vmem:[%s1 + $0x60] sm:$0xff]
  %v107 = vld [vmem:[%s1 + $0x68] sm:$0xff]
  %v108 = vld [vmem:[%s1 + $0x70] sm:$0xff]
  %v109 = vld [vmem:[%s1 + $0x78] sm:$0xff]
  %v110 = vld [vmem:[%s1 + $0x80] sm:$0xff]
  %v111 = vld [vmem:[%s1 + $0x88] sm:$0xff]
  %v112 = vld [vmem:[%s1 + $0x90] sm:$0xff]
  %v113 = vld [vmem:[%s1 + $0x98] sm:$0xff]
  %v114 = vld [vmem:[%s1 + $0xa0] sm:$0xff]
  %v115 = vld [vmem:[%s1 + $0xa8] sm:$0xff]
  %v116 = vld [vmem:[%s1 + $0xb0] sm:$0xff]
  %v117 = vld [vmem:[%s1 + $0xb8] sm:$0xff]
  %v118 = vld [vmem:[%s1 + $0xc0] sm:$0xff]
  %v119 = vld [vmem:[%s1 + $0xc8] sm:$0xff]
  %v120 = vld [vmem:[%s1 + $0xd0] sm:$0xff]
  %v121 = vld [vmem:[%s1 + $0xd8] sm:$0xff]
  %v122 = vld [vmem:[%s1 + $0xe0] sm:$0xff]
  %v123 = vld [vmem:[%s1 + $0xe8] sm:$0xff]
  %v124 = vld [vmem:[%s1 + $0xf0] sm:$0xff]
  %v125 = vld [vmem:[%s1 + $0xf8] sm:$0xff]
  %v126 = vld [vmem:[%s1 + $0x100] sm:$0xff]
  %v127 = vld [vmem:[%s1 + $0x108] sm:$0xff]
  %v128 = vld [vmem:[%s1 + $0x110] sm:$0xff]
  %v129 = vld [vmem:[%s1 + $0x118] sm:$0xff]
  %v130 = vld [vmem:[%s1 + $0x120] sm:$0xff]
  %v131 = vld [vmem:[%s1 + $0x128] sm:$0xf]
  %v132 = vpack.c.bf16 %v95, %v94
  %v133 = vpack.c.bf16 %v97, %v96
  %v134 = vpack.c.bf16 %v99, %v98
  %v135 = vpack.c.bf16 %v101, %v100
  %v136 = vpack.c.bf16 %v103, %v102
  %v137 = vpack.c.bf16 %v105, %v104
  %v138 = vpack.c.bf16 %v107, %v106
  %v139 = vpack.c.bf16 %v109, %v108
  %v140 = vpack.c.bf16 %v111, %v110
  %v141 = vpack.c.bf16 %v113, %v112
  %v142 = vpack.c.bf16 %v115, %v114
  %v143 = vpack.c.bf16 %v117, %v116
  %v144 = vpack.c.bf16 %v119, %v118
  %v145 = vpack.c.bf16 %v121, %v120
  %v146 = vpack.c.bf16 %v123, %v122
  %v147 = vpack.c.bf16 %v125, %v124
  %v148 = vpack.c.bf16 %v127, %v126
  %v149 = vpack.c.bf16 %v129, %v128
  %v150 = vpack.c.bf16 %v131, %v130
  %v151 = vld [vmem:[%s3] sm:$0xff]
  %v153 = vunpack.c.l.b16 %v151
  %v154 = vunpack.c.h.b16 %v151
  %v155 = vpack.c.b16 %v153, %v153
  %v156 = vpack.c.b16 %v154, %v154
  %vm157 = vcmask 64512
  %v159 = vsel %vm157, %v132, 0
  %v162 = vsel %vm157, %v133, 0
  %v165 = vsel %vm157, %v134, 0
  %v168 = vsel %vm157, %v135, 0
  %v171 = vsel %vm157, %v136, 0
  %v174 = vsel %vm157, %v137, 0
  %v177 = vsel %vm157, %v138, 0
  %v180 = vsel %vm157, %v139, 0
  %v183 = vsel %vm157, %v140, 0
  %v186 = vsel %vm157, %v141, 0
  %v189 = vsel %vm157, %v142, 0
  %v192 = vsel %vm157, %v143, 0
  %v195 = vsel %vm157, %v144, 0
  %v198 = vsel %vm157, %v145, 0
  %v201 = vsel %vm157, %v146, 0
  %v204 = vsel %vm157, %v147, 0
  %v207 = vsel %vm157, %v148, 0
  %v210 = vsel %vm157, %v149, 0
  %v213 = vsel %vm157, %v150, 0
  %vm215 = vcmask 1043456
  %v217 = vsel %vm215, %v155, 0
  %v220 = vsel %vm215, %v156, 0
  %222 = vmatprep.subr.bf16.mxu0 %v220
  %223 = vmatpush1.bf16.msra.mxu0 %v217
  %224 = vmatprep.subr.bf16.mxu0 0
  %225 = vmatpush1.bf16.msra.mxu0 0
  %226 = vmatprep.subr.bf16.mxu0 0
  %227 = vmatpush1.bf16.msra.mxu0 0
  %228 = vmatprep.subr.bf16.mxu0 0
  %229 = vmatpush1.bf16.msra.mxu0 0
  %230 = vmatprep.subr.bf16.mxu0 0
  %231 = vmatpush1.bf16.msra.mxu0 0
  %232 = vmatprep.subr.bf16.mxu0 0
  %233 = vmatpush1.bf16.msra.mxu0 0
  %234 = vmatprep.subr.bf16.mxu0 0
  %235 = vmatpush1.bf16.msra.mxu0 0
  %236 = vmatprep.subr.bf16.mxu0 0
  %237 = vmatpush1.bf16.msra.mxu0 0
  %238 = vmatprep.subr.bf16.mxu0 0
  %239 = vmatpush1.bf16.msra.mxu0 0
  %240 = vmatprep.subr.bf16.mxu0 0
  %241 = vmatpush1.bf16.msra.mxu0 0
  %242 = vmatprep.subr.bf16.mxu0 0
  %243 = vmatpush1.bf16.msra.mxu0 0
  %244 = vmatprep.subr.bf16.mxu0 0
  %245 = vmatpush1.bf16.msra.mxu0 0
  %246 = vmatprep.subr.bf16.mxu0 0
  %247 = vmatpush1.bf16.msra.mxu0 0
  %248 = vmatprep.subr.bf16.mxu0 0
  %249 = vmatpush1.bf16.msra.mxu0 0
  %250 = vmatprep.subr.bf16.mxu0 0
  %251 = vmatpush1.bf16.msra.mxu0 0
  %252 = vmatprep.subr.bf16.mxu0 0
  %253 = vmatpush1.bf16.msra.mxu0 0
  %254 = vmatprep.mubr.bf16.mxu0 0
  %255 = vmatmul.mubr.bf16.gmra.mrb[0].mxu0 %v159
  %v256 = vpop.f32.mrb[0].mxu0
  %v257 = vadd.f32 0.0, %v256
  %v258 = vpop.f32.mrb[0].mxu0
  %v259 = vadd.f32 0.0, %v258
  %v260 = vpop.f32.mrb[0].mxu0
  %v261 = vadd.f32 0.0, %v260
  %v262 = vpop.f32.mrb[0].mxu0
  %v263 = vadd.f32 0.0, %v262
  %264 = vmatprep.mubr.bf16.mxu0 0
  %265 = vmatmul.mubr.bf16.gmra.mrb[0].mxu0 %v162
  %v266 = vpop.f32.mrb[0].mxu0
  %v267 = vadd.f32 0.0, %v266
  %v268 = vpop.f32.mrb[0].mxu0
  %v269 = vadd.f32 0.0, %v268
  %v270 = vpop.f32.mrb[0].mxu0
  %v271 = vadd.f32 0.0, %v270
  %v272 = vpop.f32.mrb[0].mxu0
  %v273 = vadd.f32 0.0, %v272
  %274 = vmatprep.mubr.bf16.mxu0 0
  %275 = vmatmul.mubr.bf16.gmra.mrb[0].mxu0 %v165
  %v276 = vpop.f32.mrb[0].mxu0
  %v277 = vadd.f32 0.0, %v276
  %v278 = vpop.f32.mrb[0].mxu0
  %v279 = vadd.f32 0.0, %v278
  %v280 = vpop.f32.mrb[0].mxu0
  %v281 = vadd.f32 0.0, %v280
  %v282 = vpop.f32.mrb[0].mxu0
  %v283 = vadd.f32 0.0, %v282
  %284 = vmatprep.mubr.bf16.mxu0 0
  %285 = vmatmul.mubr.bf16.gmra.mrb[0].mxu0 %v168
  %v286 = vpop.f32.mrb[0].mxu0
  %v287 = vadd.f32 0.0, %v286
  %v288 = vpop.f32.mrb[0].mxu0
  %v289 = vadd.f32 0.0, %v288
  %v290 = vpop.f32.mrb[0].mxu0
  %v291 = vadd.f32 0.0, %v290
  %v292 = vpop.f32.mrb[0].mxu0
  %v293 = vadd.f32 0.0, %v292
  %294 = vmatprep.mubr.bf16.mxu0 0
  %295 = vmatmul.mubr.bf16.gmra.mrb[0].mxu0 %v171
  %v296 = vpop.f32.mrb[0].mxu0
  %v297 = vadd.f32 0.0, %v296
  %v298 = vpop.f32.mrb[0].mxu0
  %v299 = vadd.f32 0.0, %v298
  %v300 = vpop.f32.mrb[0].mxu0
  %v301 = vadd.f32 0.0, %v300
  %v302 = vpop.f32.mrb[0].mxu0
  %v303 = vadd.f32 0.0, %v302
  %304 = vmatprep.mubr.bf16.mxu0 0
  %305 = vmatmul.mubr.bf16.gmra.mrb[0].mxu0 %v174
  %v306 = vpop.f32.mrb[0].mxu0
  %v307 = vadd.f32 0.0, %v306
  %v308 = vpop.f32.mrb[0].mxu0
  %v309 = vadd.f32 0.0, %v308
  %v310 = vpop.f32.mrb[0].mxu0
  %v311 = vadd.f32 0.0, %v310
  %v312 = vpop.f32.mrb[0].mxu0
  %v313 = vadd.f32 0.0, %v312
  %314 = vmatprep.mubr.bf16.mxu0 0
  %315 = vmatmul.mubr.bf16.gmra.mrb[0].mxu0 %v177
  %v316 = vpop.f32.mrb[0].mxu0
  %v317 = vadd.f32 0.0, %v316
  %v318 = vpop.f32.mrb[0].mxu0
  %v319 = vadd.f32 0.0, %v318
  %v320 = vpop.f32.mrb[0].mxu0
  %v321 = vadd.f32 0.0, %v320
  %v322 = vpop.f32.mrb[0].mxu0
  %v323 = vadd.f32 0.0, %v322
  %324 = vmatprep.mubr.bf16.mxu0 0
  %325 = vmatmul.mubr.bf16.gmra.mrb[0].mxu0 %v180
  %v326 = vpop.f32.mrb[0].mxu0
  %v327 = vadd.f32 0.0, %v326
  %v328 = vpop.f32.mrb[0].mxu0
  %v329 = vadd.f32 0.0, %v328
  %v330 = vpop.f32.mrb[0].mxu0
  %v331 = vadd.f32 0.0, %v330
  %v332 = vpop.f32.mrb[0].mxu0
  %v333 = vadd.f32 0.0, %v332
  %334 = vmatprep.mubr.bf16.mxu0 0
  %335 = vmatmul.mubr.bf16.gmra.mrb[0].mxu0 %v183
  %v336 = vpop.f32.mrb[0].mxu0
  %v337 = vadd.f32 0.0, %v336
  %v338 = vpop.f32.mrb[0].mxu0
  %v339 = vadd.f32 0.0, %v338
  %v340 = vpop.f32.mrb[0].mxu0
  %v341 = vadd.f32 0.0, %v340
  %v342 = vpop.f32.mrb[0].mxu0
  %v343 = vadd.f32 0.0, %v342
  %344 = vmatprep.mubr.bf16.mxu0 0
  %345 = vmatmul.mubr.bf16.gmra.mrb[0].mxu0 %v186
  %v346 = vpop.f32.mrb[0].mxu0
  %v347 = vadd.f32 0.0, %v346
  %v348 = vpop.f32.mrb[0].mxu0
  %v349 = vadd.f32 0.0, %v348
  %v350 = vpop.f32.mrb[0].mxu0
  %v351 = vadd.f32 0.0, %v350
  %v352 = vpop.f32.mrb[0].mxu0
  %v353 = vadd.f32 0.0, %v352
  %354 = vmatprep.mubr.bf16.mxu0 0
  %355 = vmatmul.mubr.bf16.gmra.mrb[0].mxu0 %v189
  %v356 = vpop.f32.mrb[0].mxu0
  %v357 = vadd.f32 0.0, %v356
  %v358 = vpop.f32.mrb[0].mxu0
  %v359 = vadd.f32 0.0, %v358
  %v360 = vpop.f32.mrb[0].mxu0
  %v361 = vadd.f32 0.0, %v360
  %v362 = vpop.f32.mrb[0].mxu0
  %v363 = vadd.f32 0.0, %v362
  %364 = vmatprep.mubr.bf16.mxu0 0
  %365 = vmatmul.mubr.bf16.gmra.mrb[0].mxu0 %v192
  %v366 = vpop.f32.mrb[0].mxu0
  %v367 = vadd.f32 0.0, %v366
  %v368 = vpop.f32.mrb[0].mxu0
  %v369 = vadd.f32 0.0, %v368
  %v370 = vpop.f32.mrb[0].mxu0
  %v371 = vadd.f32 0.0, %v370
  %v372 = vpop.f32.mrb[0].mxu0
  %v373 = vadd.f32 0.0, %v372
  %374 = vmatprep.mubr.bf16.mxu0 0
  %375 = vmatmul.mubr.bf16.gmra.mrb[0].mxu0 %v195
  %v376 = vpop.f32.mrb[0].mxu0
  %v377 = vadd.f32 0.0, %v376
  %v378 = vpop.f32.mrb[0].mxu0
  %v379 = vadd.f32 0.0, %v378
  %v380 = vpop.f32.mrb[0].mxu0
  %v381 = vadd.f32 0.0, %v380
  %v382 = vpop.f32.mrb[0].mxu0
  %v383 = vadd.f32 0.0, %v382
  %384 = vmatprep.mubr.bf16.mxu0 0
  %385 = vmatmul.mubr.bf16.gmra.mrb[0].mxu0 %v198
  %v386 = vpop.f32.mrb[0].mxu0
  %v387 = vadd.f32 0.0, %v386
  %v388 = vpop.f32.mrb[0].mxu0
  %v389 = vadd.f32 0.0, %v388
  %v390 = vpop.f32.mrb[0].mxu0
  %v391 = vadd.f32 0.0, %v390
  %v392 = vpop.f32.mrb[0].mxu0
  %v393 = vadd.f32 0.0, %v392
  %394 = vmatprep.mubr.bf16.mxu0 0
  %395 = vmatmul.mubr.bf16.gmra.mrb[0].mxu0 %v201
  %v396 = vpop.f32.mrb[0].mxu0
  %v397 = vadd.f32 0.0, %v396
  %v398 = vpop.f32.mrb[0].mxu0
  %v399 = vadd.f32 0.0, %v398
  %v400 = vpop.f32.mrb[0].mxu0
  %v401 = vadd.f32 0.0, %v400
  %v402 = vpop.f32.mrb[0].mxu0
  %v403 = vadd.f32 0.0, %v402
  %404 = vmatprep.mubr.bf16.mxu0 0
  %405 = vmatmul.mubr.bf16.gmra.mrb[0].mxu0 %v204
  %v406 = vpop.f32.mrb[0].mxu0
  %v407 = vadd.f32 0.0, %v406
  %v408 = vpop.f32.mrb[0].mxu0
  %v409 = vadd.f32 0.0, %v408
  %v410 = vpop.f32.mrb[0].mxu0
  %v411 = vadd.f32 0.0, %v410
  %v412 = vpop.f32.mrb[0].mxu0
  %v413 = vadd.f32 0.0, %v412
  %414 = vmatprep.mubr.bf16.mxu0 0
  %415 = vmatmul.mubr.bf16.gmra.mrb[0].mxu0 %v207
  %v416 = vpop.f32.mrb[0].mxu0
  %v417 = vadd.f32 0.0, %v416
  %v418 = vpop.f32.mrb[0].mxu0
  %v419 = vadd.f32 0.0, %v418
  %v420 = vpop.f32.mrb[0].mxu0
  %v421 = vadd.f32 0.0, %v420
  %v422 = vpop.f32.mrb[0].mxu0
  %v423 = vadd.f32 0.0, %v422
  %424 = vmatprep.mubr.bf16.mxu0 0
  %425 = vmatmul.mubr.bf16.gmra.mrb[0].mxu0 %v210
  %v426 = vpop.f32.mrb[0].mxu0
  %v427 = vadd.f32 0.0, %v426
  %v428 = vpop.f32.mrb[0].mxu0
  %v429 = vadd.f32 0.0, %v428
  %v430 = vpop.f32.mrb[0].mxu0
  %v431 = vadd.f32 0.0, %v430
  %v432 = vpop.f32.mrb[0].mxu0
  %v433 = vadd.f32 0.0, %v432
  %434 = vmatprep.mubr.bf16.mxu0 0
  %435 = vmatmul.mubr.bf16.gmra.mrb[0].mxu0 %v213
  %v436 = vpop.f32.mrb[0].mxu0
  %v437 = vadd.f32 0.0, %v436
  %v438 = vpop.f32.mrb[0].mxu0
  %v439 = vadd.f32 0.0, %v438
  %v440 = vpop.f32.mrb[0].mxu0
  %v441 = vadd.f32 0.0, %v440
  %v442 = vpop.f32.mrb[0].mxu0
  %v443 = vadd.f32 0.0, %v442
  %444 = vdwg.mxu0
  %v448 = vunpack.c.l.b16 %v91
  %v449 = vunpack.c.h.b16 %v91
  %v450 = vunpack.c.l.b16 %v92
  %v451 = vunpack.c.h.b16 %v92
  %v452 = vunpack.c.l.b16 %v93
  %v453 = vunpack.c.h.b16 %v93
  %v454 = vpack.c.b16 %v450, %v448
  %v455 = vpack.c.b16 %v451, %v449
  %v456 = vpack.c.b16 %v452, %v452
  %v457 = vpack.c.b16 %v453, %v453
  %vm460 = vcmask 195584
  %v462 = vsel %vm460, %v72, 0
  %v465 = vsel %vm460, %v73, 0
  %v468 = vsel %vm460, %v74, 0
  %v471 = vsel %vm460, %v75, 0
  %v474 = vsel %vm460, %v76, 0
  %v477 = vsel %vm460, %v77, 0
  %v480 = vsel %vm460, %v78, 0
  %v483 = vsel %vm460, %v79, 0
  %v486 = vsel %vm460, %v80, 0
  %v489 = vsel %vm460, %v81, 0
  %v492 = vsel %vm460, %v82, 0
  %v495 = vsel %vm460, %v83, 0
  %v498 = vsel %vm460, %v84, 0
  %v501 = vsel %vm460, %v85, 0
  %v504 = vsel %vm460, %v86, 0
  %v507 = vsel %vm460, %v87, 0
  %v510 = vsel %vm460, %v88, 0
  %v513 = vsel %vm460, %v89, 0
  %v516 = vsel %vm460, %v90, 0
  %v519 = vsel %vm215, %v456, 0
  %v522 = vsel %vm215, %v457, 0
  %524 = vmatprep.subr.bf16.mxu0 %v455
  %525 = vmatpush1.bf16.msra.mxu0 %v454
  %526 = vmatprep.subr.bf16.mxu0 %v522
  %527 = vmatpush1.bf16.msra.mxu0 %v519
  %528 = vmatprep.subr.bf16.mxu0 0
  %529 = vmatpush1.bf16.msra.mxu0 0
  %530 = vmatprep.subr.bf16.mxu0 0
  %531 = vmatpush1.bf16.msra.mxu0 0
  %532 = vmatprep.subr.bf16.mxu0 0
  %533 = vmatpush1.bf16.msra.mxu0 0
  %534 = vmatprep.subr.bf16.mxu0 0
  %535 = vmatpush1.bf16.msra.mxu0 0
  %536 = vmatprep.subr.bf16.mxu0 0
  %537 = vmatpush1.bf16.msra.mxu0 0
  %538 = vmatprep.subr.bf16.mxu0 0
  %539 = vmatpush1.bf16.msra.mxu0 0
  %540 = vmatprep.subr.bf16.mxu0 0
  %541 = vmatpush1.bf16.msra.mxu0 0
  %542 = vmatprep.subr.bf16.mxu0 0
  %543 = vmatpush1.bf16.msra.mxu0 0
  %544 = vmatprep.subr.bf16.mxu0 0
  %545 = vmatpush1.bf16.msra.mxu0 0
  %546 = vmatprep.subr.bf16.mxu0 0
  %547 = vmatpush1.bf16.msra.mxu0 0
  %548 = vmatprep.subr.bf16.mxu0 0
  %549 = vmatpush1.bf16.msra.mxu0 0
  %550 = vmatprep.subr.bf16.mxu0 0
  %551 = vmatpush1.bf16.msra.mxu0 0
  %552 = vmatprep.subr.bf16.mxu0 0
  %553 = vmatpush1.bf16.msra.mxu0 0
  %554 = vmatprep.subr.bf16.mxu0 0
  %555 = vmatpush1.bf16.msra.mxu0 0
  %556 = vmatprep.mubr.bf16.mxu0 0
  %557 = vmatmul.mubr.bf16.gmra.mrb[0].mxu0 %v462
  %v558 = vpop.f32.mrb[0].mxu0
  %v559 = vadd.f32 %v257, %v558
  %v560 = vpop.f32.mrb[0].mxu0
  %v561 = vadd.f32 %v259, %v560
  %v562 = vpop.f32.mrb[0].mxu0
  %v563 = vadd.f32 %v261, %v562
  %v564 = vpop.f32.mrb[0].mxu0
  %v565 = vadd.f32 %v263, %v564
  %566 = vmatprep.mubr.bf16.mxu0 0
  %567 = vmatmul.mubr.bf16.gmra.mrb[0].mxu0 %v465
  %v568 = vpop.f32.mrb[0].mxu0
  %v569 = vadd.f32 %v267, %v568
  %v570 = vpop.f32.mrb[0].mxu0
  %v571 = vadd.f32 %v269, %v570
  %v572 = vpop.f32.mrb[0].mxu0
  %v573 = vadd.f32 %v271, %v572
  %v574 = vpop.f32.mrb[0].mxu0
  %v575 = vadd.f32 %v273, %v574
  %576 = vmatprep.mubr.bf16.mxu0 0
  %577 = vmatmul.mubr.bf16.gmra.mrb[0].mxu0 %v468
  %v578 = vpop.f32.mrb[0].mxu0
  %v579 = vadd.f32 %v277, %v578
  %v580 = vpop.f32.mrb[0].mxu0
  %v581 = vadd.f32 %v279, %v580
  %v582 = vpop.f32.mrb[0].mxu0
  %v583 = vadd.f32 %v281, %v582
  %v584 = vpop.f32.mrb[0].mxu0
  %v585 = vadd.f32 %v283, %v584
  %586 = vmatprep.mubr.bf16.mxu0 0
  %587 = vmatmul.mubr.bf16.gmra.mrb[0].mxu0 %v471
  %v588 = vpop.f32.mrb[0].mxu0
  %v589 = vadd.f32 %v287, %v588
  %v590 = vpop.f32.mrb[0].mxu0
  %v591 = vadd.f32 %v289, %v590
  %v592 = vpop.f32.mrb[0].mxu0
  %v593 = vadd.f32 %v291, %v592
  %v594 = vpop.f32.mrb[0].mxu0
  %v595 = vadd.f32 %v293, %v594
  %596 = vmatprep.mubr.bf16.mxu0 0
  %597 = vmatmul.mubr.bf16.gmra.mrb[0].mxu0 %v474
  %v598 = vpop.f32.mrb[0].mxu0
  %v599 = vadd.f32 %v297, %v598
  %v600 = vpop.f32.mrb[0].mxu0
  %v601 = vadd.f32 %v299, %v600
  %v602 = vpop.f32.mrb[0].mxu0
  %v603 = vadd.f32 %v301, %v602
  %v604 = vpop.f32.mrb[0].mxu0
  %v605 = vadd.f32 %v303, %v604
  %606 = vmatprep.mubr.bf16.mxu0 0
  %607 = vmatmul.mubr.bf16.gmra.mrb[0].mxu0 %v477
  %v608 = vpop.f32.mrb[0].mxu0
  %v609 = vadd.f32 %v307, %v608
  %v610 = vpop.f32.mrb[0].mxu0
  %v611 = vadd.f32 %v309, %v610
  %v612 = vpop.f32.mrb[0].mxu0
  %v613 = vadd.f32 %v311, %v612
  %v614 = vpop.f32.mrb[0].mxu0
  %v615 = vadd.f32 %v313, %v614
  %616 = vmatprep.mubr.bf16.mxu0 0
  %617 = vmatmul.mubr.bf16.gmra.mrb[0].mxu0 %v480
  %v618 = vpop.f32.mrb[0].mxu0
  %v619 = vadd.f32 %v317, %v618
  %v620 = vpop.f32.mrb[0].mxu0
  %v621 = vadd.f32 %v319, %v620
  %v622 = vpop.f32.mrb[0].mxu0
  %v623 = vadd.f32 %v321, %v622
  %v624 = vpop.f32.mrb[0].mxu0
  %v625 = vadd.f32 %v323, %v624
  %626 = vmatprep.mubr.bf16.mxu0 0
  %627 = vmatmul.mubr.bf16.gmra.mrb[0].mxu0 %v483
  %v628 = vpop.f32.mrb[0].mxu0
  %v629 = vadd.f32 %v327, %v628
  %v630 = vpop.f32.mrb[0].mxu0
  %v631 = vadd.f32 %v329, %v630
  %v632 = vpop.f32.mrb[0].mxu0
  %v633 = vadd.f32 %v331, %v632
  %v634 = vpop.f32.mrb[0].mxu0
  %v635 = vadd.f32 %v333, %v634
  %636 = vmatprep.mubr.bf16.mxu0 0
  %637 = vmatmul.mubr.bf16.gmra.mrb[0].mxu0 %v486
  %v638 = vpop.f32.mrb[0].mxu0
  %v639 = vadd.f32 %v337, %v638
  %v640 = vpop.f32.mrb[0].mxu0
  %v641 = vadd.f32 %v339, %v640
  %v642 = vpop.f32.mrb[0].mxu0
  %v643 = vadd.f32 %v341, %v642
  %v644 = vpop.f32.mrb[0].mxu0
  %v645 = vadd.f32 %v343, %v644
  %646 = vmatprep.mubr.bf16.mxu0 0
  %647 = vmatmul.mubr.bf16.gmra.mrb[0].mxu0 %v489
  %v648 = vpop.f32.mrb[0].mxu0
  %v649 = vadd.f32 %v347, %v648
  %v650 = vpop.f32.mrb[0].mxu0
  %v651 = vadd.f32 %v349, %v650
  %v652 = vpop.f32.mrb[0].mxu0
  %v653 = vadd.f32 %v351, %v652
  %v654 = vpop.f32.mrb[0].mxu0
  %v655 = vadd.f32 %v353, %v654
  %656 = vmatprep.mubr.bf16.mxu0 0
  %657 = vmatmul.mubr.bf16.gmra.mrb[0].mxu0 %v492
  %v658 = vpop.f32.mrb[0].mxu0
  %v659 = vadd.f32 %v357, %v658
  %v660 = vpop.f32.mrb[0].mxu0
  %v661 = vadd.f32 %v359, %v660
  %v662 = vpop.f32.mrb[0].mxu0
  %v663 = vadd.f32 %v361, %v662
  %v664 = vpop.f32.mrb[0].mxu0
  %v665 = vadd.f32 %v363, %v664
  %666 = vmatprep.mubr.bf16.mxu0 0
  %667 = vmatmul.mubr.bf16.gmra.mrb[0].mxu0 %v495
  %v668 = vpop.f32.mrb[0].mxu0
  %v669 = vadd.f32 %v367, %v668
  %v670 = vpop.f32.mrb[0].mxu0
  %v671 = vadd.f32 %v369, %v670
  %v672 = vpop.f32.mrb[0].mxu0
  %v673 = vadd.f32 %v371, %v672
  %v674 = vpop.f32.mrb[0].mxu0
  %v675 = vadd.f32 %v373, %v674
  %676 = vmatprep.mubr.bf16.mxu0 0
  %677 = vmatmul.mubr.bf16.gmra.mrb[0].mxu0 %v498
  %v678 = vpop.f32.mrb[0].mxu0
  %v679 = vadd.f32 %v377, %v678
  %v680 = vpop.f32.mrb[0].mxu0
  %v681 = vadd.f32 %v379, %v680
  %v682 = vpop.f32.mrb[0].mxu0
  %v683 = vadd.f32 %v381, %v682
  %v684 = vpop.f32.mrb[0].mxu0
  %v685 = vadd.f32 %v383, %v684
  %686 = vmatprep.mubr.bf16.mxu0 0
  %687 = vmatmul.mubr.bf16.gmra.mrb[0].mxu0 %v501
  %v688 = vpop.f32.mrb[0].mxu0
  %v689 = vadd.f32 %v387, %v688
  %v690 = vpop.f32.mrb[0].mxu0
  %v691 = vadd.f32 %v389, %v690
  %v692 = vpop.f32.mrb[0].mxu0
  %v693 = vadd.f32 %v391, %v692
  %v694 = vpop.f32.mrb[0].mxu0
  %v695 = vadd.f32 %v393, %v694
  %696 = vmatprep.mubr.bf16.mxu0 0
  %697 = vmatmul.mubr.bf16.gmra.mrb[0].mxu0 %v504
  %v698 = vpop.f32.mrb[0].mxu0
  %v699 = vadd.f32 %v397, %v698
  %v700 = vpop.f32.mrb[0].mxu0
  %v701 = vadd.f32 %v399, %v700
  %v702 = vpop.f32.mrb[0].mxu0
  %v703 = vadd.f32 %v401, %v702
  %v704 = vpop.f32.mrb[0].mxu0
  %v705 = vadd.f32 %v403, %v704
  %706 = vmatprep.mubr.bf16.mxu0 0
  %707 = vmatmul.mubr.bf16.gmra.mrb[0].mxu0 %v507
  %v708 = vpop.f32.mrb[0].mxu0
  %v709 = vadd.f32 %v407, %v708
  %v710 = vpop.f32.mrb[0].mxu0
  %v711 = vadd.f32 %v409, %v710
  %v712 = vpop.f32.mrb[0].mxu0
  %v713 = vadd.f32 %v411, %v712
  %v714 = vpop.f32.mrb[0].mxu0
  %v715 = vadd.f32 %v413, %v714
  %716 = vmatprep.mubr.bf16.mxu0 0
  %717 = vmatmul.mubr.bf16.gmra.mrb[0].mxu0 %v510
  %v718 = vpop.f32.mrb[0].mxu0
  %v719 = vadd.f32 %v417, %v718
  %v720 = vpop.f32.mrb[0].mxu0
  %v721 = vadd.f32 %v419, %v720
  %v722 = vpop.f32.mrb[0].mxu0
  %v723 = vadd.f32 %v421, %v722
  %v724 = vpop.f32.mrb[0].mxu0
  %v725 = vadd.f32 %v423, %v724
  %726 = vmatprep.mubr.bf16.mxu0 0
  %727 = vmatmul.mubr.bf16.gmra.mrb[0].mxu0 %v513
  %v728 = vpop.f32.mrb[0].mxu0
  %v729 = vadd.f32 %v427, %v728
  %v730 = vpop.f32.mrb[0].mxu0
  %v731 = vadd.f32 %v429, %v730
  %v732 = vpop.f32.mrb[0].mxu0
  %v733 = vadd.f32 %v431, %v732
  %v734 = vpop.f32.mrb[0].mxu0
  %v735 = vadd.f32 %v433, %v734
  %736 = vmatprep.mubr.bf16.mxu0 0
  %737 = vmatmul.mubr.bf16.gmra.mrb[0].mxu0 %v516
  %v738 = vpop.f32.mrb[0].mxu0
  %v739 = vadd.f32 %v437, %v738
  %v740 = vpop.f32.mrb[0].mxu0
  %v741 = vadd.f32 %v439, %v740
  %v742 = vpop.f32.mrb[0].mxu0
  %v743 = vadd.f32 %v441, %v742
  %v744 = vpop.f32.mrb[0].mxu0
  %v745 = vadd.f32 %v443, %v744
  %746 = vdwg.mxu0
  %v747 = vld [vmem:[%s4] sm:$0x3]
  %v749 = vlaneseq
  %v750 = vshrl.u32 %v749, 7
  %v751 = vsub.s32 0, %v750
  %v752 = vrot.slane %v747, %v751
  %v753 = vlaneseq
  %v754 = vshrl.u32 %v753, 7
  %v755 = vsub.s32 1, %v754
  %v756 = vrot.slane %v747, %v755
  %v759 = vadd.f32 %v559, %v752
  %v760 = vadd.f32 %v561, %v756
  %v761 = vadd.f32 %v563, %v752
  %v762 = vadd.f32 %v565, %v756
  %v763 = vadd.f32 %v569, %v752
  %v764 = vadd.f32 %v571, %v756
  %v765 = vadd.f32 %v573, %v752
  %v766 = vadd.f32 %v575, %v756
  %v767 = vadd.f32 %v579, %v752
  %v768 = vadd.f32 %v581, %v756
  %v769 = vadd.f32 %v583, %v752
  %v770 = vadd.f32 %v585, %v756
  %v771 = vadd.f32 %v589, %v752
  %v772 = vadd.f32 %v591, %v756
  %v773 = vadd.f32 %v593, %v752
  %v774 = vadd.f32 %v595, %v756
  %v775 = vadd.f32 %v599, %v752
  %v776 = vadd.f32 %v601, %v756
  %v777 = vadd.f32 %v603, %v752
  %v778 = vadd.f32 %v605, %v756
  %v779 = vadd.f32 %v609, %v752
  %v780 = vadd.f32 %v611, %v756
  %v781 = vadd.f32 %v613, %v752
  %v782 = vadd.f32 %v615, %v756
  %v783 = vadd.f32 %v619, %v752
  %v784 = vadd.f32 %v621, %v756
  %v785 = vadd.f32 %v623, %v752
  %v786 = vadd.f32 %v625, %v756
  %v787 = vadd.f32 %v629, %v752
  %v788 = vadd.f32 %v631, %v756
  %v789 = vadd.f32 %v633, %v752
  %v790 = vadd.f32 %v635, %v756
  %v791 = vadd.f32 %v639, %v752
  %v792 = vadd.f32 %v641, %v756
  %v793 = vadd.f32 %v643, %v752
  %v794 = vadd.f32 %v645, %v756
  %v795 = vadd.f32 %v649, %v752
  %v796 = vadd.f32 %v651, %v756
  %v797 = vadd.f32 %v653, %v752
  %v798 = vadd.f32 %v655, %v756
  %v799 = vadd.f32 %v659, %v752
  %v800 = vadd.f32 %v661, %v756
  %v801 = vadd.f32 %v663, %v752
  %v802 = vadd.f32 %v665, %v756
  %v803 = vadd.f32 %v669, %v752
  %v804 = vadd.f32 %v671, %v756
  %v805 = vadd.f32 %v673, %v752
  %v806 = vadd.f32 %v675, %v756
  %v807 = vadd.f32 %v679, %v752
  %v808 = vadd.f32 %v681, %v756
  %v809 = vadd.f32 %v683, %v752
  %v810 = vadd.f32 %v685, %v756
  %v811 = vadd.f32 %v689, %v752
  %v812 = vadd.f32 %v691, %v756
  %v813 = vadd.f32 %v693, %v752
  %v814 = vadd.f32 %v695, %v756
  %v815 = vadd.f32 %v699, %v752
  %v816 = vadd.f32 %v701, %v756
  %v817 = vadd.f32 %v703, %v752
  %v818 = vadd.f32 %v705, %v756
  %v819 = vadd.f32 %v709, %v752
  %v820 = vadd.f32 %v711, %v756
  %v821 = vadd.f32 %v713, %v752
  %v822 = vadd.f32 %v715, %v756
  %v823 = vadd.f32 %v719, %v752
  %v824 = vadd.f32 %v721, %v756
  %v825 = vadd.f32 %v723, %v752
  %v826 = vadd.f32 %v725, %v756
  %v827 = vadd.f32 %v729, %v752
  %v828 = vadd.f32 %v731, %v756
  %v829 = vadd.f32 %v733, %v752
  %v830 = vadd.f32 %v735, %v756
  %v831 = vadd.f32 %v739, %v752
  %v832 = vadd.f32 %v741, %v756
  %v833 = vadd.f32 %v743, %v752
  %v834 = vadd.f32 %v745, %v756
  %v835 = vmax.f32 %v759, 0.0
  %v836 = vmax.f32 %v760, 0.0
  %v837 = vmax.f32 %v761, 0.0
  %v838 = vmax.f32 %v762, 0.0
  %v839 = vmax.f32 %v763, 0.0
  %v840 = vmax.f32 %v764, 0.0
  %v841 = vmax.f32 %v765, 0.0
  %v842 = vmax.f32 %v766, 0.0
  %v843 = vmax.f32 %v767, 0.0
  %v844 = vmax.f32 %v768, 0.0
  %v845 = vmax.f32 %v769, 0.0
  %v846 = vmax.f32 %v770, 0.0
  %v847 = vmax.f32 %v771, 0.0
  %v848 = vmax.f32 %v772, 0.0
  %v849 = vmax.f32 %v773, 0.0
  %v850 = vmax.f32 %v774, 0.0
  %v851 = vmax.f32 %v775, 0.0
  %v852 = vmax.f32 %v776, 0.0
  %v853 = vmax.f32 %v777, 0.0
  %v854 = vmax.f32 %v778, 0.0
  %v855 = vmax.f32 %v779, 0.0
  %v856 = vmax.f32 %v780, 0.0
  %v857 = vmax.f32 %v781, 0.0
  %v858 = vmax.f32 %v782, 0.0
  %v859 = vmax.f32 %v783, 0.0
  %v860 = vmax.f32 %v784, 0.0
  %v861 = vmax.f32 %v785, 0.0
  %v862 = vmax.f32 %v786, 0.0
  %v863 = vmax.f32 %v787, 0.0
  %v864 = vmax.f32 %v788, 0.0
  %v865 = vmax.f32 %v789, 0.0
  %v866 = vmax.f32 %v790, 0.0
  %v867 = vmax.f32 %v791, 0.0
  %v868 = vmax.f32 %v792, 0.0
  %v869 = vmax.f32 %v793, 0.0
  %v870 = vmax.f32 %v794, 0.0
  %v871 = vmax.f32 %v795, 0.0
  %v872 = vmax.f32 %v796, 0.0
  %v873 = vmax.f32 %v797, 0.0
  %v874 = vmax.f32 %v798, 0.0
  %v875 = vmax.f32 %v799, 0.0
  %v876 = vmax.f32 %v800, 0.0
  %v877 = vmax.f32 %v801, 0.0
  %v878 = vmax.f32 %v802, 0.0
  %v879 = vmax.f32 %v803, 0.0
  %v880 = vmax.f32 %v804, 0.0
  %v881 = vmax.f32 %v805, 0.0
  %v882 = vmax.f32 %v806, 0.0
  %v883 = vmax.f32 %v807, 0.0
  %v884 = vmax.f32 %v808, 0.0
  %v885 = vmax.f32 %v809, 0.0
  %v886 = vmax.f32 %v810, 0.0
  %v887 = vmax.f32 %v811, 0.0
  %v888 = vmax.f32 %v812, 0.0
  %v889 = vmax.f32 %v813, 0.0
  %v890 = vmax.f32 %v814, 0.0
  %v891 = vmax.f32 %v815, 0.0
  %v892 = vmax.f32 %v816, 0.0
  %v893 = vmax.f32 %v817, 0.0
  %v894 = vmax.f32 %v818, 0.0
  %v895 = vmax.f32 %v819, 0.0
  %v896 = vmax.f32 %v820, 0.0
  %v897 = vmax.f32 %v821, 0.0
  %v898 = vmax.f32 %v822, 0.0
  %v899 = vmax.f32 %v823, 0.0
  %v900 = vmax.f32 %v824, 0.0
  %v901 = vmax.f32 %v825, 0.0
  %v902 = vmax.f32 %v826, 0.0
  %v903 = vmax.f32 %v827, 0.0
  %v904 = vmax.f32 %v828, 0.0
  %v905 = vmax.f32 %v829, 0.0
  %v906 = vmax.f32 %v830, 0.0
  %v907 = vmax.f32 %v831, 0.0
  %v908 = vmax.f32 %v832, 0.0
  %v909 = vmax.f32 %v833, 0.0
  %v910 = vmax.f32 %v834, 0.0
  %v911 = vpack.c.bf16 %v837, %v835
  %v912 = vpack.c.bf16 %v838, %v836
  %v913 = vpack.c.bf16 %v841, %v839
  %v914 = vpack.c.bf16 %v842, %v840
  %v915 = vpack.c.bf16 %v845, %v843
  %v916 = vpack.c.bf16 %v846, %v844
  %v917 = vpack.c.bf16 %v849, %v847
  %v918 = vpack.c.bf16 %v850, %v848
  %v919 = vpack.c.bf16 %v853, %v851
  %v920 = vpack.c.bf16 %v854, %v852
  %v921 = vpack.c.bf16 %v857, %v855
  %v922 = vpack.c.bf16 %v858, %v856
  %v923 = vpack.c.bf16 %v861, %v859
  %v924 = vpack.c.bf16 %v862, %v860
  %v925 = vpack.c.bf16 %v865, %v863
  %v926 = vpack.c.bf16 %v866, %v864
  %v927 = vpack.c.bf16 %v869, %v867
  %v928 = vpack.c.bf16 %v870, %v868
  %v929 = vpack.c.bf16 %v873, %v871
  %v930 = vpack.c.bf16 %v874, %v872
  %v931 = vpack.c.bf16 %v877, %v875
  %v932 = vpack.c.bf16 %v878, %v876
  %v933 = vpack.c.bf16 %v881, %v879
  %v934 = vpack.c.bf16 %v882, %v880
  %v935 = vpack.c.bf16 %v885, %v883
  %v936 = vpack.c.bf16 %v886, %v884
  %v937 = vpack.c.bf16 %v889, %v887
  %v938 = vpack.c.bf16 %v890, %v888
  %v939 = vpack.c.bf16 %v893, %v891
  %v940 = vpack.c.bf16 %v894, %v892
  %v941 = vpack.c.bf16 %v897, %v895
  %v942 = vpack.c.bf16 %v898, %v896
  %v943 = vpack.c.bf16 %v901, %v899
  %v944 = vpack.c.bf16 %v902, %v900
  %v945 = vpack.c.bf16 %v905, %v903
  %v946 = vpack.c.bf16 %v906, %v904
  %v947 = vpack.c.bf16 %v909, %v907
  %v948 = vpack.c.bf16 %v910, %v908
  %v949 = vld [vmem:[%s5] sm:$0xff]
  %v950 = vld [vmem:[%s5 + $0x8] sm:$0xff]
  %v951 = vld [vmem:[%s5 + $0x10] sm:$0xff]
  %v952 = vld [vmem:[%s5 + $0x18] sm:$0xff]
  %v953 = vld [vmem:[%s5 + $0x20] sm:$0xff]
  %v954 = vld [vmem:[%s5 + $0x28] sm:$0xff]
  %v955 = vld [vmem:[%s5 + $0x30] sm:$0xff]
  %v956 = vld [vmem:[%s5 + $0x38] sm:$0xff]
  %v957 = vld [vmem:[%s5 + $0x40] sm:$0xff]
  %v958 = vld [vmem:[%s5 + $0x48] sm:$0xff]
  %v959 = vld [vmem:[%s5 + $0x50] sm:$0xff]
  %v960 = vld [vmem:[%s5 + $0x58] sm:$0xff]
  %v961 = vld [vmem:[%s5 + $0x60] sm:$0xff]
  %v962 = vld [vmem:[%s5 + $0x68] sm:$0xff]
  %v963 = vld [vmem:[%s5 + $0x70] sm:$0xff]
  %v964 = vld [vmem:[%s5 + $0x78] sm:$0xff]
  %v965 = vld [vmem:[%s5 + $0x80] sm:$0xff]
  %v966 = vld [vmem:[%s5 + $0x88] sm:$0xff]
  %v967 = vld [vmem:[%s5 + $0x90] sm:$0xff]
  %v968 = vld [vmem:[%s5 + $0x98] sm:$0xff]
  %v969 = vld [vmem:[%s5 + $0xa0] sm:$0xff]
  %v970 = vld [vmem:[%s5 + $0xa8] sm:$0xff]
  %v971 = vld [vmem:[%s5 + $0xb0] sm:$0xff]
  %v972 = vld [vmem:[%s5 + $0xb8] sm:$0xff]
  %v973 = vld [vmem:[%s5 + $0xc0] sm:$0xff]
  %v974 = vld [vmem:[%s5 + $0xc8] sm:$0xff]
  %v975 = vld [vmem:[%s5 + $0xd0] sm:$0xff]
  %v976 = vld [vmem:[%s5 + $0xd8] sm:$0xff]
  %v977 = vld [vmem:[%s5 + $0xe0] sm:$0xff]
  %v978 = vld [vmem:[%s5 + $0xe8] sm:$0xff]
  %v979 = vld [vmem:[%s5 + $0xf0] sm:$0xff]
  %v980 = vld [vmem:[%s5 + $0xf8] sm:$0xff]
  %v981 = vld [vmem:[%s6] sm:$0x3]
  %v983 = vlaneseq
  %v984 = vshrl.u32 %v983, 7
  %v985 = vsub.s32 0, %v984
  %v986 = vrot.slane %v981, %v985
  %v987 = vlaneseq
  %v988 = vshrl.u32 %v987, 7
  %v989 = vsub.s32 1, %v988
  %v990 = vrot.slane %v981, %v989
  %v1025 = vunpack.c.l.b16 %v949
  %v1026 = vunpack.c.h.b16 %v949
  %v1027 = vunpack.c.l.b16 %v950
  %v1028 = vunpack.c.h.b16 %v950
  %v1029 = vunpack.c.l.b16 %v951
  %v1030 = vunpack.c.h.b16 %v951
  %v1031 = vunpack.c.l.b16 %v952
  %v1032 = vunpack.c.h.b16 %v952
  %v1033 = vunpack.c.l.b16 %v953
  %v1034 = vunpack.c.h.b16 %v953
  %v1035 = vunpack.c.l.b16 %v954
  %v1036 = vunpack.c.h.b16 %v954
  %v1037 = vunpack.c.l.b16 %v955
  %v1038 = vunpack.c.h.b16 %v955
  %v1039 = vunpack.c.l.b16 %v956
  %v1040 = vunpack.c.h.b16 %v956
  %v1041 = vunpack.c.l.b16 %v957
  %v1042 = vunpack.c.h.b16 %v957
  %v1043 = vunpack.c.l.b16 %v958
  %v1044 = vunpack.c.h.b16 %v958
  %v1045 = vunpack.c.l.b16 %v959
  %v1046 = vunpack.c.h.b16 %v959
  %v1047 = vunpack.c.l.b16 %v960
  %v1048 = vunpack.c.h.b16 %v960
  %v1049 = vunpack.c.l.b16 %v961
  %v1050 = vunpack.c.h.b16 %v961
  %v1051 = vunpack.c.l.b16 %v962
  %v1052 = vunpack.c.h.b16 %v962
  %v1053 = vunpack.c.l.b16 %v963
  %v1054 = vunpack.c.h.b16 %v963
  %v1055 = vunpack.c.l.b16 %v964
  %v1056 = vunpack.c.h.b16 %v964
  %v1057 = vunpack.c.l.b16 %v965
  %v1058 = vunpack.c.h.b16 %v965
  %v1059 = vunpack.c.l.b16 %v966
  %v1060 = vunpack.c.h.b16 %v966
  %v1061 = vunpack.c.l.b16 %v967
  %v1062 = vunpack.c.h.b16 %v967
  %v1063 = vunpack.c.l.b16 %v968
  %v1064 = vunpack.c.h.b16 %v968
  %v1065 = vunpack.c.l.b16 %v969
  %v1066 = vunpack.c.h.b16 %v969
  %v1067 = vunpack.c.l.b16 %v970
  %v1068 = vunpack.c.h.b16 %v970
  %v1069 = vunpack.c.l.b16 %v971
  %v1070 = vunpack.c.h.b16 %v971
  %v1071 = vunpack.c.l.b16 %v972
  %v1072 = vunpack.c.h.b16 %v972
  %v1073 = vunpack.c.l.b16 %v973
  %v1074 = vunpack.c.h.b16 %v973
  %v1075 = vunpack.c.l.b16 %v974
  %v1076 = vunpack.c.h.b16 %v974
  %v1077 = vunpack.c.l.b16 %v975
  %v1078 = vunpack.c.h.b16 %v975
  %v1079 = vunpack.c.l.b16 %v976
  %v1080 = vunpack.c.h.b16 %v976
  %v1081 = vunpack.c.l.b16 %v977
  %v1082 = vunpack.c.h.b16 %v977
  %v1083 = vunpack.c.l.b16 %v978
  %v1084 = vunpack.c.h.b16 %v978
  %v1085 = vunpack.c.l.b16 %v979
  %v1086 = vunpack.c.h.b16 %v979
  %v1087 = vunpack.c.l.b16 %v980
  %v1088 = vunpack.c.h.b16 %v980
  %v1089 = vpack.c.b16 %v1027, %v1025
  %v1090 = vpack.c.b16 %v1028, %v1026
  %v1091 = vpack.c.b16 %v1031, %v1029
  %v1092 = vpack.c.b16 %v1032, %v1030
  %v1093 = vpack.c.b16 %v1035, %v1033
  %v1094 = vpack.c.b16 %v1036, %v1034
  %v1095 = vpack.c.b16 %v1039, %v1037
  %v1096 = vpack.c.b16 %v1040, %v1038
  %v1097 = vpack.c.b16 %v1043, %v1041
  %v1098 = vpack.c.b16 %v1044, %v1042
  %v1099 = vpack.c.b16 %v1047, %v1045
  %v1100 = vpack.c.b16 %v1048, %v1046
  %v1101 = vpack.c.b16 %v1051, %v1049
  %v1102 = vpack.c.b16 %v1052, %v1050
  %v1103 = vpack.c.b16 %v1055, %v1053
  %v1104 = vpack.c.b16 %v1056, %v1054
  %v1105 = vpack.c.b16 %v1059, %v1057
  %v1106 = vpack.c.b16 %v1060, %v1058
  %v1107 = vpack.c.b16 %v1063, %v1061
  %v1108 = vpack.c.b16 %v1064, %v1062
  %v1109 = vpack.c.b16 %v1067, %v1065
  %v1110 = vpack.c.b16 %v1068, %v1066
  %v1111 = vpack.c.b16 %v1071, %v1069
  %v1112 = vpack.c.b16 %v1072, %v1070
  %v1113 = vpack.c.b16 %v1075, %v1073
  %v1114 = vpack.c.b16 %v1076, %v1074
  %v1115 = vpack.c.b16 %v1079, %v1077
  %v1116 = vpack.c.b16 %v1080, %v1078
  %v1117 = vpack.c.b16 %v1083, %v1081
  %v1118 = vpack.c.b16 %v1084, %v1082
  %v1119 = vpack.c.b16 %v1087, %v1085
  %v1120 = vpack.c.b16 %v1088, %v1086
  %1153 = vmatprep.subr.bf16.mxu0 %v1090
  %1154 = vmatpush1.bf16.msra.mxu0 %v1089
  %1155 = vmatprep.subr.bf16.mxu0 %v1092
  %1156 = vmatpush1.bf16.msra.mxu0 %v1091
  %1157 = vmatprep.subr.bf16.mxu0 %v1094
  %1158 = vmatpush1.bf16.msra.mxu0 %v1093
  %1159 = vmatprep.subr.bf16.mxu0 %v1096
  %1160 = vmatpush1.bf16.msra.mxu0 %v1095
  %1161 = vmatprep.subr.bf16.mxu0 %v1098
  %1162 = vmatpush1.bf16.msra.mxu0 %v1097
  %1163 = vmatprep.subr.bf16.mxu0 %v1100
  %1164 = vmatpush1.bf16.msra.mxu0 %v1099
  %1165 = vmatprep.subr.bf16.mxu0 %v1102
  %1166 = vmatpush1.bf16.msra.mxu0 %v1101
  %1167 = vmatprep.subr.bf16.mxu0 %v1104
  %1168 = vmatpush1.bf16.msra.mxu0 %v1103
  %1169 = vmatprep.subr.bf16.mxu0 %v1106
  %1170 = vmatpush1.bf16.msra.mxu0 %v1105
  %1171 = vmatprep.subr.bf16.mxu0 %v1108
  %1172 = vmatpush1.bf16.msra.mxu0 %v1107
  %1173 = vmatprep.subr.bf16.mxu0 %v1110
  %1174 = vmatpush1.bf16.msra.mxu0 %v1109
  %1175 = vmatprep.subr.bf16.mxu0 %v1112
  %1176 = vmatpush1.bf16.msra.mxu0 %v1111
  %1177 = vmatprep.subr.bf16.mxu0 %v1114
  %1178 = vmatpush1.bf16.msra.mxu0 %v1113
  %1179 = vmatprep.subr.bf16.mxu0 %v1116
  %1180 = vmatpush1.bf16.msra.mxu0 %v1115
  %1181 = vmatprep.subr.bf16.mxu0 %v1118
  %1182 = vmatpush1.bf16.msra.mxu0 %v1117
  %1183 = vmatprep.subr.bf16.mxu0 %v1120
  %1184 = vmatpush1.bf16.msra.mxu0 %v1119
  %1185 = vmatprep.mubr.bf16.mxu0 %v912
  %1186 = vmatmul.mubr.bf16.gmra.mrb[0].mxu0 %v911
  %v1187 = vpop.f32.mrb[0].mxu0
  %v1188 = vadd.f32 %v986, %v1187
  %v1189 = vpop.f32.mrb[0].mxu0
  %v1190 = vadd.f32 %v990, %v1189
  %v1191 = vpop.f32.mrb[0].mxu0
  %v1192 = vadd.f32 %v986, %v1191
  %v1193 = vpop.f32.mrb[0].mxu0
  %v1194 = vadd.f32 %v990, %v1193
  %1195 = vmatprep.mubr.bf16.mxu0 %v914
  %1196 = vmatmul.mubr.bf16.gmra.mrb[0].mxu0 %v913
  %v1197 = vpop.f32.mrb[0].mxu0
  %v1198 = vadd.f32 %v986, %v1197
  %v1199 = vpop.f32.mrb[0].mxu0
  %v1200 = vadd.f32 %v990, %v1199
  %v1201 = vpop.f32.mrb[0].mxu0
  %v1202 = vadd.f32 %v986, %v1201
  %v1203 = vpop.f32.mrb[0].mxu0
  %v1204 = vadd.f32 %v990, %v1203
  %1205 = vmatprep.mubr.bf16.mxu0 %v916
  %1206 = vmatmul.mubr.bf16.gmra.mrb[0].mxu0 %v915
  %v1207 = vpop.f32.mrb[0].mxu0
  %v1208 = vadd.f32 %v986, %v1207
  %v1209 = vpop.f32.mrb[0].mxu0
  %v1210 = vadd.f32 %v990, %v1209
  %v1211 = vpop.f32.mrb[0].mxu0
  %v1212 = vadd.f32 %v986, %v1211
  %v1213 = vpop.f32.mrb[0].mxu0
  %v1214 = vadd.f32 %v990, %v1213
  %1215 = vmatprep.mubr.bf16.mxu0 %v918
  %1216 = vmatmul.mubr.bf16.gmra.mrb[0].mxu0 %v917
  %v1217 = vpop.f32.mrb[0].mxu0
  %v1218 = vadd.f32 %v986, %v1217
  %v1219 = vpop.f32.mrb[0].mxu0
  %v1220 = vadd.f32 %v990, %v1219
  %v1221 = vpop.f32.mrb[0].mxu0
  %v1222 = vadd.f32 %v986, %v1221
  %v1223 = vpop.f32.mrb[0].mxu0
  %v1224 = vadd.f32 %v990, %v1223
  %1225 = vmatprep.mubr.bf16.mxu0 %v920
  %1226 = vmatmul.mubr.bf16.gmra.mrb[0].mxu0 %v919
  %v1227 = vpop.f32.mrb[0].mxu0
  %v1228 = vadd.f32 %v986, %v1227
  %v1229 = vpop.f32.mrb[0].mxu0
  %v1230 = vadd.f32 %v990, %v1229
  %v1231 = vpop.f32.mrb[0].mxu0
  %v1232 = vadd.f32 %v986, %v1231
  %v1233 = vpop.f32.mrb[0].mxu0
  %v1234 = vadd.f32 %v990, %v1233
  %1235 = vmatprep.mubr.bf16.mxu0 %v922
  %1236 = vmatmul.mubr.bf16.gmra.mrb[0].mxu0 %v921
  %v1237 = vpop.f32.mrb[0].mxu0
  %v1238 = vadd.f32 %v986, %v1237
  %v1239 = vpop.f32.mrb[0].mxu0
  %v1240 = vadd.f32 %v990, %v1239
  %v1241 = vpop.f32.mrb[0].mxu0
  %v1242 = vadd.f32 %v986, %v1241
  %v1243 = vpop.f32.mrb[0].mxu0
  %v1244 = vadd.f32 %v990, %v1243
  %1245 = vmatprep.mubr.bf16.mxu0 %v924
  %1246 = vmatmul.mubr.bf16.gmra.mrb[0].mxu0 %v923
  %v1247 = vpop.f32.mrb[0].mxu0
  %v1248 = vadd.f32 %v986, %v1247
  %v1249 = vpop.f32.mrb[0].mxu0
  %v1250 = vadd.f32 %v990, %v1249
  %v1251 = vpop.f32.mrb[0].mxu0
  %v1252 = vadd.f32 %v986, %v1251
  %v1253 = vpop.f32.mrb[0].mxu0
  %v1254 = vadd.f32 %v990, %v1253
  %1255 = vmatprep.mubr.bf16.mxu0 %v926
  %1256 = vmatmul.mubr.bf16.gmra.mrb[0].mxu0 %v925
  %v1257 = vpop.f32.mrb[0].mxu0
  %v1258 = vadd.f32 %v986, %v1257
  %v1259 = vpop.f32.mrb[0].mxu0
  %v1260 = vadd.f32 %v990, %v1259
  %v1261 = vpop.f32.mrb[0].mxu0
  %v1262 = vadd.f32 %v986, %v1261
  %v1263 = vpop.f32.mrb[0].mxu0
  %v1264 = vadd.f32 %v990, %v1263
  %1265 = vmatprep.mubr.bf16.mxu0 %v928
  %1266 = vmatmul.mubr.bf16.gmra.mrb[0].mxu0 %v927
  %v1267 = vpop.f32.mrb[0].mxu0
  %v1268 = vadd.f32 %v986, %v1267
  %v1269 = vpop.f32.mrb[0].mxu0
  %v1270 = vadd.f32 %v990, %v1269
  %v1271 = vpop.f32.mrb[0].mxu0
  %v1272 = vadd.f32 %v986, %v1271
  %v1273 = vpop.f32.mrb[0].mxu0
  %v1274 = vadd.f32 %v990, %v1273
  %1275 = vmatprep.mubr.bf16.mxu0 %v930
  %1276 = vmatmul.mubr.bf16.gmra.mrb[0].mxu0 %v929
  %v1277 = vpop.f32.mrb[0].mxu0
  %v1278 = vadd.f32 %v986, %v1277
  %v1279 = vpop.f32.mrb[0].mxu0
  %v1280 = vadd.f32 %v990, %v1279
  %v1281 = vpop.f32.mrb[0].mxu0
  %v1282 = vadd.f32 %v986, %v1281
  %v1283 = vpop.f32.mrb[0].mxu0
  %v1284 = vadd.f32 %v990, %v1283
  %1285 = vmatprep.mubr.bf16.mxu0 %v932
  %1286 = vmatmul.mubr.bf16.gmra.mrb[0].mxu0 %v931
  %v1287 = vpop.f32.mrb[0].mxu0
  %v1288 = vadd.f32 %v986, %v1287
  %v1289 = vpop.f32.mrb[0].mxu0
  %v1290 = vadd.f32 %v990, %v1289
  %v1291 = vpop.f32.mrb[0].mxu0
  %v1292 = vadd.f32 %v986, %v1291
  %v1293 = vpop.f32.mrb[0].mxu0
  %v1294 = vadd.f32 %v990, %v1293
  %1295 = vmatprep.mubr.bf16.mxu0 %v934
  %1296 = vmatmul.mubr.bf16.gmra.mrb[0].mxu0 %v933
  %v1297 = vpop.f32.mrb[0].mxu0
  %v1298 = vadd.f32 %v986, %v1297
  %v1299 = vpop.f32.mrb[0].mxu0
  %v1300 = vadd.f32 %v990, %v1299
  %v1301 = vpop.f32.mrb[0].mxu0
  %v1302 = vadd.f32 %v986, %v1301
  %v1303 = vpop.f32.mrb[0].mxu0
  %v1304 = vadd.f32 %v990, %v1303
  %1305 = vmatprep.mubr.bf16.mxu0 %v936
  %1306 = vmatmul.mubr.bf16.gmra.mrb[0].mxu0 %v935
  %v1307 = vpop.f32.mrb[0].mxu0
  %v1308 = vadd.f32 %v986, %v1307
  %v1309 = vpop.f32.mrb[0].mxu0
  %v1310 = vadd.f32 %v990, %v1309
  %v1311 = vpop.f32.mrb[0].mxu0
  %v1312 = vadd.f32 %v986, %v1311
  %v1313 = vpop.f32.mrb[0].mxu0
  %v1314 = vadd.f32 %v990, %v1313
  %1315 = vmatprep.mubr.bf16.mxu0 %v938
  %1316 = vmatmul.mubr.bf16.gmra.mrb[0].mxu0 %v937
  %v1317 = vpop.f32.mrb[0].mxu0
  %v1318 = vadd.f32 %v986, %v1317
  %v1319 = vpop.f32.mrb[0].mxu0
  %v1320 = vadd.f32 %v990, %v1319
  %v1321 = vpop.f32.mrb[0].mxu0
  %v1322 = vadd.f32 %v986, %v1321
  %v1323 = vpop.f32.mrb[0].mxu0
  %v1324 = vadd.f32 %v990, %v1323
  %1325 = vmatprep.mubr.bf16.mxu0 %v940
  %1326 = vmatmul.mubr.bf16.gmra.mrb[0].mxu0 %v939
  %v1327 = vpop.f32.mrb[0].mxu0
  %v1328 = vadd.f32 %v986, %v1327
  %v1329 = vpop.f32.mrb[0].mxu0
  %v1330 = vadd.f32 %v990, %v1329
  %v1331 = vpop.f32.mrb[0].mxu0
  %v1332 = vadd.f32 %v986, %v1331
  %v1333 = vpop.f32.mrb[0].mxu0
  %v1334 = vadd.f32 %v990, %v1333
  %1335 = vmatprep.mubr.bf16.mxu0 %v942
  %1336 = vmatmul.mubr.bf16.gmra.mrb[0].mxu0 %v941
  %v1337 = vpop.f32.mrb[0].mxu0
  %v1338 = vadd.f32 %v986, %v1337
  %v1339 = vpop.f32.mrb[0].mxu0
  %v1340 = vadd.f32 %v990, %v1339
  %v1341 = vpop.f32.mrb[0].mxu0
  %v1342 = vadd.f32 %v986, %v1341
  %v1343 = vpop.f32.mrb[0].mxu0
  %v1344 = vadd.f32 %v990, %v1343
  %1345 = vmatprep.mubr.bf16.mxu0 %v944
  %1346 = vmatmul.mubr.bf16.gmra.mrb[0].mxu0 %v943
  %v1347 = vpop.f32.mrb[0].mxu0
  %v1348 = vadd.f32 %v986, %v1347
  %v1349 = vpop.f32.mrb[0].mxu0
  %v1350 = vadd.f32 %v990, %v1349
  %v1351 = vpop.f32.mrb[0].mxu0
  %v1352 = vadd.f32 %v986, %v1351
  %v1353 = vpop.f32.mrb[0].mxu0
  %v1354 = vadd.f32 %v990, %v1353
  %1355 = vmatprep.mubr.bf16.mxu0 %v946
  %1356 = vmatmul.mubr.bf16.gmra.mrb[0].mxu0 %v945
  %v1357 = vpop.f32.mrb[0].mxu0
  %v1358 = vadd.f32 %v986, %v1357
  %v1359 = vpop.f32.mrb[0].mxu0
  %v1360 = vadd.f32 %v990, %v1359
  %v1361 = vpop.f32.mrb[0].mxu0
  %v1362 = vadd.f32 %v986, %v1361
  %v1363 = vpop.f32.mrb[0].mxu0
  %v1364 = vadd.f32 %v990, %v1363
  %1365 = vmatprep.mubr.bf16.mxu0 %v948
  %1366 = vmatmul.mubr.bf16.gmra.mrb[0].mxu0 %v947
  %v1367 = vpop.f32.mrb[0].mxu0
  %v1368 = vadd.f32 %v986, %v1367
  %v1369 = vpop.f32.mrb[0].mxu0
  %v1370 = vadd.f32 %v990, %v1369
  %v1371 = vpop.f32.mrb[0].mxu0
  %v1372 = vadd.f32 %v986, %v1371
  %v1373 = vpop.f32.mrb[0].mxu0
  %v1374 = vadd.f32 %v990, %v1373
  %1375 = vdwg.mxu0
  %v1376 = vmax.f32 %v1188, 0.0
  %v1377 = vmax.f32 %v1190, 0.0
  %v1378 = vmax.f32 %v1192, 0.0
  %v1379 = vmax.f32 %v1194, 0.0
  %v1380 = vmax.f32 %v1198, 0.0
  %v1381 = vmax.f32 %v1200, 0.0
  %v1382 = vmax.f32 %v1202, 0.0
  %v1383 = vmax.f32 %v1204, 0.0
  %v1384 = vmax.f32 %v1208, 0.0
  %v1385 = vmax.f32 %v1210, 0.0
  %v1386 = vmax.f32 %v1212, 0.0
  %v1387 = vmax.f32 %v1214, 0.0
  %v1388 = vmax.f32 %v1218, 0.0
  %v1389 = vmax.f32 %v1220, 0.0
  %v1390 = vmax.f32 %v1222, 0.0
  %v1391 = vmax.f32 %v1224, 0.0
  %v1392 = vmax.f32 %v1228, 0.0
  %v1393 = vmax.f32 %v1230, 0.0
  %v1394 = vmax.f32 %v1232, 0.0
  %v1395 = vmax.f32 %v1234, 0.0
  %v1396 = vmax.f32 %v1238, 0.0
  %v1397 = vmax.f32 %v1240, 0.0
  %v1398 = vmax.f32 %v1242, 0.0
  %v1399 = vmax.f32 %v1244, 0.0
  %v1400 = vmax.f32 %v1248, 0.0
  %v1401 = vmax.f32 %v1250, 0.0
  %v1402 = vmax.f32 %v1252, 0.0
  %v1403 = vmax.f32 %v1254, 0.0
  %v1404 = vmax.f32 %v1258, 0.0
  %v1405 = vmax.f32 %v1260, 0.0
  %v1406 = vmax.f32 %v1262, 0.0
  %v1407 = vmax.f32 %v1264, 0.0
  %v1408 = vmax.f32 %v1268, 0.0
  %v1409 = vmax.f32 %v1270, 0.0
  %v1410 = vmax.f32 %v1272, 0.0
  %v1411 = vmax.f32 %v1274, 0.0
  %v1412 = vmax.f32 %v1278, 0.0
  %v1413 = vmax.f32 %v1280, 0.0
  %v1414 = vmax.f32 %v1282, 0.0
  %v1415 = vmax.f32 %v1284, 0.0
  %v1416 = vmax.f32 %v1288, 0.0
  %v1417 = vmax.f32 %v1290, 0.0
  %v1418 = vmax.f32 %v1292, 0.0
  %v1419 = vmax.f32 %v1294, 0.0
  %v1420 = vmax.f32 %v1298, 0.0
  %v1421 = vmax.f32 %v1300, 0.0
  %v1422 = vmax.f32 %v1302, 0.0
  %v1423 = vmax.f32 %v1304, 0.0
  %v1424 = vmax.f32 %v1308, 0.0
  %v1425 = vmax.f32 %v1310, 0.0
  %v1426 = vmax.f32 %v1312, 0.0
  %v1427 = vmax.f32 %v1314, 0.0
  %v1428 = vmax.f32 %v1318, 0.0
  %v1429 = vmax.f32 %v1320, 0.0
  %v1430 = vmax.f32 %v1322, 0.0
  %v1431 = vmax.f32 %v1324, 0.0
  %v1432 = vmax.f32 %v1328, 0.0
  %v1433 = vmax.f32 %v1330, 0.0
  %v1434 = vmax.f32 %v1332, 0.0
  %v1435 = vmax.f32 %v1334, 0.0
  %v1436 = vmax.f32 %v1338, 0.0
  %v1437 = vmax.f32 %v1340, 0.0
  %v1438 = vmax.f32 %v1342, 0.0
  %v1439 = vmax.f32 %v1344, 0.0
  %v1440 = vmax.f32 %v1348, 0.0
  %v1441 = vmax.f32 %v1350, 0.0
  %v1442 = vmax.f32 %v1352, 0.0
  %v1443 = vmax.f32 %v1354, 0.0
  %v1444 = vmax.f32 %v1358, 0.0
  %v1445 = vmax.f32 %v1360, 0.0
  %v1446 = vmax.f32 %v1362, 0.0
  %v1447 = vmax.f32 %v1364, 0.0
  %v1448 = vmax.f32 %v1368, 0.0
  %v1449 = vmax.f32 %v1370, 0.0
  %v1450 = vmax.f32 %v1372, 0.0
  %v1451 = vmax.f32 %v1374, 0.0
  %v1452 = vld [vmem:[%s7] sm:$0x3]
  %v1454 = vlaneseq
  %v1455 = vshrl.u32 %v1454, 7
  %v1456 = vsub.s32 0, %v1455
  %v1457 = vrot.slane %v1452, %v1456
  %v1458 = vlaneseq
  %v1459 = vshrl.u32 %v1458, 7
  %v1460 = vsub.s32 1, %v1459
  %v1461 = vrot.slane %v1452, %v1460
  %v1464 = vmul.f32 %v1376, %v1457
  %v1465 = vmul.f32 %v1377, %v1461
  %v1466 = vmul.f32 %v1378, %v1457
  %v1467 = vmul.f32 %v1379, %v1461
  %v1468 = vmul.f32 %v1380, %v1457
  %v1469 = vmul.f32 %v1381, %v1461
  %v1470 = vmul.f32 %v1382, %v1457
  %v1471 = vmul.f32 %v1383, %v1461
  %v1472 = vmul.f32 %v1384, %v1457
  %v1473 = vmul.f32 %v1385, %v1461
  %v1474 = vmul.f32 %v1386, %v1457
  %v1475 = vmul.f32 %v1387, %v1461
  %v1476 = vmul.f32 %v1388, %v1457
  %v1477 = vmul.f32 %v1389, %v1461
  %v1478 = vmul.f32 %v1390, %v1457
  %v1479 = vmul.f32 %v1391, %v1461
  %v1480 = vmul.f32 %v1392, %v1457
  %v1481 = vmul.f32 %v1393, %v1461
  %v1482 = vmul.f32 %v1394, %v1457
  %v1483 = vmul.f32 %v1395, %v1461
  %v1484 = vmul.f32 %v1396, %v1457
  %v1485 = vmul.f32 %v1397, %v1461
  %v1486 = vmul.f32 %v1398, %v1457
  %v1487 = vmul.f32 %v1399, %v1461
  %v1488 = vmul.f32 %v1400, %v1457
  %v1489 = vmul.f32 %v1401, %v1461
  %v1490 = vmul.f32 %v1402, %v1457
  %v1491 = vmul.f32 %v1403, %v1461
  %v1492 = vmul.f32 %v1404, %v1457
  %v1493 = vmul.f32 %v1405, %v1461
  %v1494 = vmul.f32 %v1406, %v1457
  %v1495 = vmul.f32 %v1407, %v1461
  %v1496 = vmul.f32 %v1408, %v1457
  %v1497 = vmul.f32 %v1409, %v1461
  %v1498 = vmul.f32 %v1410, %v1457
  %v1499 = vmul.f32 %v1411, %v1461
  %v1500 = vmul.f32 %v1412, %v1457
  %v1501 = vmul.f32 %v1413, %v1461
  %v1502 = vmul.f32 %v1414, %v1457
  %v1503 = vmul.f32 %v1415, %v1461
  %v1504 = vmul.f32 %v1416, %v1457
  %v1505 = vmul.f32 %v1417, %v1461
  %v1506 = vmul.f32 %v1418, %v1457
  %v1507 = vmul.f32 %v1419, %v1461
  %v1508 = vmul.f32 %v1420, %v1457
  %v1509 = vmul.f32 %v1421, %v1461
  %v1510 = vmul.f32 %v1422, %v1457
  %v1511 = vmul.f32 %v1423, %v1461
  %v1512 = vmul.f32 %v1424, %v1457
  %v1513 = vmul.f32 %v1425, %v1461
  %v1514 = vmul.f32 %v1426, %v1457
  %v1515 = vmul.f32 %v1427, %v1461
  %v1516 = vmul.f32 %v1428, %v1457
  %v1517 = vmul.f32 %v1429, %v1461
  %v1518 = vmul.f32 %v1430, %v1457
  %v1519 = vmul.f32 %v1431, %v1461
  %v1520 = vmul.f32 %v1432, %v1457
  %v1521 = vmul.f32 %v1433, %v1461
  %v1522 = vmul.f32 %v1434, %v1457
  %v1523 = vmul.f32 %v1435, %v1461
  %v1524 = vmul.f32 %v1436, %v1457
  %v1525 = vmul.f32 %v1437, %v1461
  %v1526 = vmul.f32 %v1438, %v1457
  %v1527 = vmul.f32 %v1439, %v1461
  %v1528 = vmul.f32 %v1440, %v1457
  %v1529 = vmul.f32 %v1441, %v1461
  %v1530 = vmul.f32 %v1442, %v1457
  %v1531 = vmul.f32 %v1443, %v1461
  %v1532 = vmul.f32 %v1444, %v1457
  %v1533 = vmul.f32 %v1445, %v1461
  %v1534 = vmul.f32 %v1446, %v1457
  %v1535 = vmul.f32 %v1447, %v1461
  %v1536 = vmul.f32 %v1448, %v1457
  %v1537 = vmul.f32 %v1449, %v1461
  %v1538 = vmul.f32 %v1450, %v1457
  %v1539 = vmul.f32 %v1451, %v1461
  %v1540 = vadd.f32 %v1464, %v1465
  %1541 = vadd.xlane.f32.xlu0 %v1540
  %v1542 = vpop.xlane.xlu0 %1541
  %v1543 = vadd.f32 %v1466, %v1467
  %1544 = vadd.xlane.f32.xlu0 %v1543
  %v1545 = vpop.xlane.xlu0 %1544
  %v1546 = vadd.f32 %v1468, %v1469
  %1547 = vadd.xlane.f32.xlu0 %v1546
  %v1548 = vpop.xlane.xlu0 %1547
  %v1549 = vadd.f32 %v1470, %v1471
  %1550 = vadd.xlane.f32.xlu0 %v1549
  %v1551 = vpop.xlane.xlu0 %1550
  %v1552 = vadd.f32 %v1472, %v1473
  %1553 = vadd.xlane.f32.xlu0 %v1552
  %v1554 = vpop.xlane.xlu0 %1553
  %v1555 = vadd.f32 %v1474, %v1475
  %1556 = vadd.xlane.f32.xlu0 %v1555
  %v1557 = vpop.xlane.xlu0 %1556
  %v1558 = vadd.f32 %v1476, %v1477
  %1559 = vadd.xlane.f32.xlu0 %v1558
  %v1560 = vpop.xlane.xlu0 %1559
  %v1561 = vadd.f32 %v1478, %v1479
  %1562 = vadd.xlane.f32.xlu0 %v1561
  %v1563 = vpop.xlane.xlu0 %1562
  %v1564 = vadd.f32 %v1480, %v1481
  %1565 = vadd.xlane.f32.xlu0 %v1564
  %v1566 = vpop.xlane.xlu0 %1565
  %v1567 = vadd.f32 %v1482, %v1483
  %1568 = vadd.xlane.f32.xlu0 %v1567
  %v1569 = vpop.xlane.xlu0 %1568
  %v1570 = vadd.f32 %v1484, %v1485
  %1571 = vadd.xlane.f32.xlu0 %v1570
  %v1572 = vpop.xlane.xlu0 %1571
  %v1573 = vadd.f32 %v1486, %v1487
  %1574 = vadd.xlane.f32.xlu0 %v1573
  %v1575 = vpop.xlane.xlu0 %1574
  %v1576 = vadd.f32 %v1488, %v1489
  %1577 = vadd.xlane.f32.xlu0 %v1576
  %v1578 = vpop.xlane.xlu0 %1577
  %v1579 = vadd.f32 %v1490, %v1491
  %1580 = vadd.xlane.f32.xlu0 %v1579
  %v1581 = vpop.xlane.xlu0 %1580
  %v1582 = vadd.f32 %v1492, %v1493
  %1583 = vadd.xlane.f32.xlu0 %v1582
  %v1584 = vpop.xlane.xlu0 %1583
  %v1585 = vadd.f32 %v1494, %v1495
  %1586 = vadd.xlane.f32.xlu0 %v1585
  %v1587 = vpop.xlane.xlu0 %1586
  %v1588 = vadd.f32 %v1496, %v1497
  %1589 = vadd.xlane.f32.xlu0 %v1588
  %v1590 = vpop.xlane.xlu0 %1589
  %v1591 = vadd.f32 %v1498, %v1499
  %1592 = vadd.xlane.f32.xlu0 %v1591
  %v1593 = vpop.xlane.xlu0 %1592
  %v1594 = vadd.f32 %v1500, %v1501
  %1595 = vadd.xlane.f32.xlu0 %v1594
  %v1596 = vpop.xlane.xlu0 %1595
  %v1597 = vadd.f32 %v1502, %v1503
  %1598 = vadd.xlane.f32.xlu0 %v1597
  %v1599 = vpop.xlane.xlu0 %1598
  %v1600 = vadd.f32 %v1504, %v1505
  %1601 = vadd.xlane.f32.xlu0 %v1600
  %v1602 = vpop.xlane.xlu0 %1601
  %v1603 = vadd.f32 %v1506, %v1507
  %1604 = vadd.xlane.f32.xlu0 %v1603
  %v1605 = vpop.xlane.xlu0 %1604
  %v1606 = vadd.f32 %v1508, %v1509
  %1607 = vadd.xlane.f32.xlu0 %v1606
  %v1608 = vpop.xlane.xlu0 %1607
  %v1609 = vadd.f32 %v1510, %v1511
  %1610 = vadd.xlane.f32.xlu0 %v1609
  %v1611 = vpop.xlane.xlu0 %1610
  %v1612 = vadd.f32 %v1512, %v1513
  %1613 = vadd.xlane.f32.xlu0 %v1612
  %v1614 = vpop.xlane.xlu0 %1613
  %v1615 = vadd.f32 %v1514, %v1515
  %1616 = vadd.xlane.f32.xlu0 %v1615
  %v1617 = vpop.xlane.xlu0 %1616
  %v1618 = vadd.f32 %v1516, %v1517
  %1619 = vadd.xlane.f32.xlu0 %v1618
  %v1620 = vpop.xlane.xlu0 %1619
  %v1621 = vadd.f32 %v1518, %v1519
  %1622 = vadd.xlane.f32.xlu0 %v1621
  %v1623 = vpop.xlane.xlu0 %1622
  %v1624 = vadd.f32 %v1520, %v1521
  %1625 = vadd.xlane.f32.xlu0 %v1624
  %v1626 = vpop.xlane.xlu0 %1625
  %v1627 = vadd.f32 %v1522, %v1523
  %1628 = vadd.xlane.f32.xlu0 %v1627
  %v1629 = vpop.xlane.xlu0 %1628
  %v1630 = vadd.f32 %v1524, %v1525
  %1631 = vadd.xlane.f32.xlu0 %v1630
  %v1632 = vpop.xlane.xlu0 %1631
  %v1633 = vadd.f32 %v1526, %v1527
  %1634 = vadd.xlane.f32.xlu0 %v1633
  %v1635 = vpop.xlane.xlu0 %1634
  %v1636 = vadd.f32 %v1528, %v1529
  %1637 = vadd.xlane.f32.xlu0 %v1636
  %v1638 = vpop.xlane.xlu0 %1637
  %v1639 = vadd.f32 %v1530, %v1531
  %1640 = vadd.xlane.f32.xlu0 %v1639
  %v1641 = vpop.xlane.xlu0 %1640
  %v1642 = vadd.f32 %v1532, %v1533
  %1643 = vadd.xlane.f32.xlu0 %v1642
  %v1644 = vpop.xlane.xlu0 %1643
  %v1645 = vadd.f32 %v1534, %v1535
  %1646 = vadd.xlane.f32.xlu0 %v1645
  %v1647 = vpop.xlane.xlu0 %1646
  %v1648 = vadd.f32 %v1536, %v1537
  %1649 = vadd.xlane.f32.xlu0 %v1648
  %v1650 = vpop.xlane.xlu0 %1649
  %v1651 = vsel %vm215, %v1538, 0.0
  %v1652 = vsel %vm215, %v1539, 0.0
  %v1653 = vadd.f32 %v1651, %v1652
  %1654 = vadd.xlane.f32.xlu0 %v1653
  %v1655 = vpop.xlane.xlu0 %1654
  %s1656 = sld [smem:[#allocation2]]
  %v1657 = vstv %s1656
  %v1658 = vadd.f32 %v1542, %v1657
  %v1659 = vadd.f32 %v1545, %v1657
  %v1660 = vadd.f32 %v1548, %v1657
  %v1661 = vadd.f32 %v1551, %v1657
  %v1662 = vadd.f32 %v1554, %v1657
  %v1663 = vadd.f32 %v1557, %v1657
  %v1664 = vadd.f32 %v1560, %v1657
  %v1665 = vadd.f32 %v1563, %v1657
  %v1666 = vadd.f32 %v1566, %v1657
  %v1667 = vadd.f32 %v1569, %v1657
  %v1668 = vadd.f32 %v1572, %v1657
  %v1669 = vadd.f32 %v1575, %v1657
  %v1670 = vadd.f32 %v1578, %v1657
  %v1671 = vadd.f32 %v1581, %v1657
  %v1672 = vadd.f32 %v1584, %v1657
  %v1673 = vadd.f32 %v1587, %v1657
  %v1674 = vadd.f32 %v1590, %v1657
  %v1675 = vadd.f32 %v1593, %v1657
  %v1676 = vadd.f32 %v1596, %v1657
  %v1677 = vadd.f32 %v1599, %v1657
  %v1678 = vadd.f32 %v1602, %v1657
  %v1679 = vadd.f32 %v1605, %v1657
  %v1680 = vadd.f32 %v1608, %v1657
  %v1681 = vadd.f32 %v1611, %v1657
  %v1682 = vadd.f32 %v1614, %v1657
  %v1683 = vadd.f32 %v1617, %v1657
  %v1684 = vadd.f32 %v1620, %v1657
  %v1685 = vadd.f32 %v1623, %v1657
  %v1686 = vadd.f32 %v1626, %v1657
  %v1687 = vadd.f32 %v1629, %v1657
  %v1688 = vadd.f32 %v1632, %v1657
  %v1689 = vadd.f32 %v1635, %v1657
  %v1690 = vadd.f32 %v1638, %v1657
  %v1691 = vadd.f32 %v1641, %v1657
  %v1692 = vadd.f32 %v1644, %v1657
  %v1693 = vadd.f32 %v1647, %v1657
  %v1694 = vadd.f32 %v1650, %v1657
  %v1695 = vadd.f32 %v1655, %v1657
  %vm1696 = vcmask 7168
  %1697 = vst.msk [vmem:[%s9] sm:$0xff] %vm1696, %v1658
  %1698 = vst.msk [vmem:[%s9 + $0x8] sm:$0xff] %vm1696, %v1659
  %1699 = vst.msk [vmem:[%s9 + $0x10] sm:$0xff] %vm1696, %v1660
  %1700 = vst.msk [vmem:[%s9 + $0x18] sm:$0xff] %vm1696, %v1661
  %1701 = vst.msk [vmem:[%s9 + $0x20] sm:$0xff] %vm1696, %v1662
  %1702 = vst.msk [vmem:[%s9 + $0x28] sm:$0xff] %vm1696, %v1663
  %1703 = vst.msk [vmem:[%s9 + $0x30] sm:$0xff] %vm1696, %v1664
  %1704 = vst.msk [vmem:[%s9 + $0x38] sm:$0xff] %vm1696, %v1665
  %1705 = vst.msk [vmem:[%s9 + $0x40] sm:$0xff] %vm1696, %v1666
  %1706 = vst.msk [vmem:[%s9 + $0x48] sm:$0xff] %vm1696, %v1667
  %1707 = vst.msk [vmem:[%s9 + $0x50] sm:$0xff] %vm1696, %v1668
  %1708 = vst.msk [vmem:[%s9 + $0x58] sm:$0xff] %vm1696, %v1669
  %1709 = vst.msk [vmem:[%s9 + $0x60] sm:$0xff] %vm1696, %v1670
  %1710 = vst.msk [vmem:[%s9 + $0x68] sm:$0xff] %vm1696, %v1671
  %1711 = vst.msk [vmem:[%s9 + $0x70] sm:$0xff] %vm1696, %v1672
  %1712 = vst.msk [vmem:[%s9 + $0x78] sm:$0xff] %vm1696, %v1673
  %1713 = vst.msk [vmem:[%s9 + $0x80] sm:$0xff] %vm1696, %v1674
  %1714 = vst.msk [vmem:[%s9 + $0x88] sm:$0xff] %vm1696, %v1675
  %1715 = vst.msk [vmem:[%s9 + $0x90] sm:$0xff] %vm1696, %v1676
  %1716 = vst.msk [vmem:[%s9 + $0x98] sm:$0xff] %vm1696, %v1677
  %1717 = vst.msk [vmem:[%s9 + $0xa0] sm:$0xff] %vm1696, %v1678
  %1718 = vst.msk [vmem:[%s9 + $0xa8] sm:$0xff] %vm1696, %v1679
  %1719 = vst.msk [vmem:[%s9 + $0xb0] sm:$0xff] %vm1696, %v1680
  %1720 = vst.msk [vmem:[%s9 + $0xb8] sm:$0xff] %vm1696, %v1681
  %1721 = vst.msk [vmem:[%s9 + $0xc0] sm:$0xff] %vm1696, %v1682
  %1722 = vst.msk [vmem:[%s9 + $0xc8] sm:$0xff] %vm1696, %v1683
  %1723 = vst.msk [vmem:[%s9 + $0xd0] sm:$0xff] %vm1696, %v1684
  %1724 = vst.msk [vmem:[%s9 + $0xd8] sm:$0xff] %vm1696, %v1685
  %1725 = vst.msk [vmem:[%s9 + $0xe0] sm:$0xff] %vm1696, %v1686
  %1726 = vst.msk [vmem:[%s9 + $0xe8] sm:$0xff] %vm1696, %v1687
  %1727 = vst.msk [vmem:[%s9 + $0xf0] sm:$0xff] %vm1696, %v1688
  %1728 = vst.msk [vmem:[%s9 + $0xf8] sm:$0xff] %vm1696, %v1689
  %1729 = vst.msk [vmem:[%s9 + $0x100] sm:$0xff] %vm1696, %v1690
  %1730 = vst.msk [vmem:[%s9 + $0x108] sm:$0xff] %vm1696, %v1691
  %1731 = vst.msk [vmem:[%s9 + $0x110] sm:$0xff] %vm1696, %v1692
  %1732 = vst.msk [vmem:[%s9 + $0x118] sm:$0xff] %vm1696, %v1693
  %1733 = vst.msk [vmem:[%s9 + $0x120] sm:$0xff] %vm1696, %v1694
  %vm1734 = vcmask 3072
  %1735 = vst.msk [vmem:[%s9 + $0x128] sm:$0xf] %vm1734, %v1695
  // Predicated region
  $region38: #{critic_forward.1} parent=0 // pred_check
    _
  $region39: #{critic_forward.1} parent=0 // pred_check_branch
    %1737 = sbr.rel (0) target = $region41
  $region40: #{critic_forward.1} parent=0 // pred_region
    _
  $region41: #{critic_forward.1} parent=0 // pred_fallthru
    _
  // Predicated region
  $region42: #{critic_forward.1} parent=0 // pred_check
    _
  $region43: #{critic_forward.1} parent=0 // pred_check_branch
    %1739 = sbr.rel (0) target = $region45
  $region44: #{critic_forward.1} parent=0 // pred_region
    _
  $region45: #{critic_forward.1} parent=0 // pred_fallthru
    _

</llo_original>
